<compile_context>
chip_gen: v7x
topology: tpu7x:2x2x1
jax: 0.10.0
libtpu: 0.0.40
codegen_flags: <defaults>
</compile_context>

<pallas_src>
import functools

import jax
import jax.numpy as jnp
from jax.experimental import pallas as pl
from jax.experimental.pallas import tpu as pltpu

KH, KW = 3, 3  # static conv kernel size, from Conv2d(3, 3, 3)


def _conv_relu_kernel(x_ref, w_ref, b_ref, o_ref, *, N, C, W):
    """relu(conv2d(x) + b), stride 1, VALID padding, lane-dense accumulate-then-crop.

    x_ref: VMEM (N*C, H*W)      input planes, spatial flattened onto lanes
    w_ref: VMEM (OC, C*KH*KW)   conv taps (PyTorch OIHW order, I/H/W flattened)
    b_ref: VMEM (OC, 1)         bias column
    o_ref: VMEM (N, OC, H*W)    padded output slab (caller crops to OH x OW)
    """
    _, HW = x_ref.shape
    OC = w_ref.shape[0]

    for n in range(N):
        acc = jnp.zeros((OC, HW), jnp.float32)
        for c in range(C):
            # One channel plane, broadcast once across the OC sublane rows (hoisted out
            # of the tap loop so the broadcast_in_dim is not re-emitted per tap).
            plane = jnp.broadcast_to(x_ref[pl.ds(n * C + c, 1), :], (OC, HW))
            for kh in range(KH):
                for kw in range(KW):
                    delta = kh * W + kw
                    # Roll left by `delta`: shifted[t] = plane[(t + delta) % HW].
                    # For every kept output position (oh < OH, ow < OW) no wrap occurs,
                    # and wrapped garbage only lands in the cropped padding region.
                    shifted = pltpu.roll(plane, HW - delta, axis=1) if delta else plane
                    tap = (c * KH + kh) * KW + kw
                    w_col = w_ref[:, pl.ds(tap, 1)]          # (OC, 1) tap weights
                    acc = acc + w_col * shifted              # column FMA, full lanes
        # One dense, full-lane store per image (bias add + ReLU fused).
        o_ref[n] = jnp.maximum(acc + b_ref[...], 0.0)


def conv_relu(x_nchw, weight_oihw, bias):
    """relu(conv2d(x, weight, bias)), stride=1, padding=0, NCHW in / NCHW out.

    x_nchw:      (N, C, H, W)    float32
    weight_oihw: (OC, C, KH, KW) float32
    bias:        (OC,)           float32
    returns:     (N, OC, OH, OW) float32
    """
    N, C, H, W = x_nchw.shape
    OC = weight_oihw.shape[0]
    OH, OW = H - KH + 1, W - KW + 1
    HW = H * W

    # Free, contiguous reshapes (no transposes, no HBM round-trips).
    x_flat = x_nchw.reshape(N * C, HW)
    w_mat = weight_oihw.reshape(OC, C * KH * KW)  # w_mat[oc, (c*KH+kh)*KW+kw]
    b_col = bias.reshape(OC, 1)

    kernel = functools.partial(_conv_relu_kernel, N=N, C=C, W=W)

    flops = 2 * N * OC * C * KH * KW * HW + 2 * N * OC * HW
    bytes_accessed = 4 * (x_flat.size + w_mat.size + b_col.size + N * OC * HW)

    slab = pl.pallas_call(
        kernel,
        out_shape=jax.ShapeDtypeStruct((N, OC, HW), jnp.float32),
        in_specs=[
            pl.BlockSpec(memory_space=pltpu.MemorySpace.VMEM),  # x planes
            pl.BlockSpec(memory_space=pltpu.MemorySpace.VMEM),  # weights
            pl.BlockSpec(memory_space=pltpu.MemorySpace.VMEM),  # bias
        ],
        out_specs=pl.BlockSpec(memory_space=pltpu.MemorySpace.VMEM),
        cost_estimate=pl.CostEstimate(
            flops=flops, transcendentals=0, bytes_accessed=bytes_accessed),
    )(x_flat, w_mat, b_col)

    # Padded (H, W) slab -> valid (OH, OW) window: a tiny wrapper-side crop so all
    # in-kernel stores stay full-lane and unmasked.
    return slab.reshape(N, OC, H, W)[:, :, :OH, :OW]


def reference_conv_relu(x_nchw, weight_oihw, bias):
    out = jax.lax.conv_general_dilated(
        x_nchw, weight_oihw,
        window_strides=(1, 1), padding="VALID",
        dimension_numbers=("NCHW", "OIHW", "NCHW"),
    )
    return jnp.maximum(out + bias.reshape(1, -1, 1, 1), 0.0)


if __name__ == "__main__":
    key = jax.random.PRNGKey(0)
    k_x, k_w, k_b = jax.random.split(key, 3)

    # Shapes consistent with the module: Conv2d(3, 3, 3), 32x32 spatial; batch of 2 to
    # exercise the folded-batch (single grid step) path.
    N, C, H, W = 2, 3, 32, 32
    OC = 3

    x = jax.random.normal(k_x, (N, C, H, W), dtype=jnp.float32)

    # Deterministic init mimicking PyTorch Conv2d defaults (uniform +/- 1/sqrt(fan_in)).
    fan_in = C * KH * KW
    bound = 1.0 / (fan_in ** 0.5)
    weight = jax.random.uniform(k_w, (OC, C, KH, KW), jnp.float32, -bound, bound)
    bias = jax.random.uniform(k_b, (OC,), jnp.float32, -bound, bound)

    # TODO(synk): forward() also calls F.batch_norm with mismatched args and discards the
    # result (v2); it does not affect the returned value, so it is intentionally omitted.

    out = conv_relu(x, weight, bias)
    jax.block_until_ready(out)

    ref = reference_conv_relu(x, weight, bias)
    assert out.shape == (N, OC, H - KH + 1, W - KW + 1)
    assert jnp.allclose(out, ref, atol=1e-5, rtol=1e-5)

    print("KERNEL_OK")
</pallas_src>

<mosaic_0001>
module attributes {stable_mosaic.version = 11 : i64} {
  func.func @_conv_relu_kernel(%arg0: memref<6x1024xf32, #tpu.memory_space<vmem>>, %arg1: memref<3x27xf32, #tpu.memory_space<vmem>>, %arg2: memref<3x1xf32, #tpu.memory_space<vmem>>, %arg3: memref<2x3x1024xf32, #tpu.memory_space<vmem>>) attributes {dimension_semantics = [], scalar_prefetch = 0 : i64, scratch_operands = 0 : i64, tpu.core_type = #tpu.core_type<tc>} {
    %cst = arith.constant 0.000000e+00 : f32
    %0 = vector.broadcast %cst : f32 to vector<3x1024xf32>
    %c0 = arith.constant 0 : index
    %c0_0 = arith.constant 0 : index
    %1 = vector.load %arg0[%c0, %c0_0] : memref<6x1024xf32, #tpu.memory_space<vmem>>, vector<1x1024xf32>
    %2 = vector.shape_cast %1 : vector<1x1024xf32> to vector<1x1024xf32>
    %3 = vector.broadcast %2 : vector<1x1024xf32> to vector<3x1024xf32>
    %c0_1 = arith.constant 0 : index
    %c0_2 = arith.constant 0 : index
    %4 = vector.load %arg1[%c0_1, %c0_2] : memref<3x27xf32, #tpu.memory_space<vmem>>, vector<3x1xf32>
    %5 = vector.broadcast %4 : vector<3x1xf32> to vector<3x1024xf32>
    %6 = arith.mulf %5, %3 : vector<3x1024xf32>
    %7 = arith.addf %0, %6 : vector<3x1024xf32>
    %c1023_i32 = arith.constant 1023 : i32
    %8 = tpu.dynamic_rotate %3 by %c1023_i32 dim 1 : vector<3x1024xf32>, i32 -> vector<3x1024xf32>
    %c0_3 = arith.constant 0 : index
    %c1 = arith.constant 1 : index
    %9 = vector.load %arg1[%c0_3, %c1] : memref<3x27xf32, #tpu.memory_space<vmem>>, vector<3x1xf32>
    %10 = vector.broadcast %9 : vector<3x1xf32> to vector<3x1024xf32>
    %11 = arith.mulf %10, %8 : vector<3x1024xf32>
    %12 = arith.addf %7, %11 : vector<3x1024xf32>
    %c1022_i32 = arith.constant 1022 : i32
    %13 = tpu.dynamic_rotate %3 by %c1022_i32 dim 1 : vector<3x1024xf32>, i32 -> vector<3x1024xf32>
    %c0_4 = arith.constant 0 : index
    %c2 = arith.constant 2 : index
    %14 = vector.load %arg1[%c0_4, %c2] : memref<3x27xf32, #tpu.memory_space<vmem>>, vector<3x1xf32>
    %15 = vector.broadcast %14 : vector<3x1xf32> to vector<3x1024xf32>
    %16 = arith.mulf %15, %13 : vector<3x1024xf32>
    %17 = arith.addf %12, %16 : vector<3x1024xf32>
    %c992_i32 = arith.constant 992 : i32
    %18 = tpu.dynamic_rotate %3 by %c992_i32 dim 1 : vector<3x1024xf32>, i32 -> vector<3x1024xf32>
    %c0_5 = arith.constant 0 : index
    %c3 = arith.constant 3 : index
    %19 = vector.load %arg1[%c0_5, %c3] : memref<3x27xf32, #tpu.memory_space<vmem>>, vector<3x1xf32>
    %20 = vector.broadcast %19 : vector<3x1xf32> to vector<3x1024xf32>
    %21 = arith.mulf %20, %18 : vector<3x1024xf32>
    %22 = arith.addf %17, %21 : vector<3x1024xf32>
    %c991_i32 = arith.constant 991 : i32
    %23 = tpu.dynamic_rotate %3 by %c991_i32 dim 1 : vector<3x1024xf32>, i32 -> vector<3x1024xf32>
    %c0_6 = arith.constant 0 : index
    %c4 = arith.constant 4 : index
    %24 = vector.load %arg1[%c0_6, %c4] : memref<3x27xf32, #tpu.memory_space<vmem>>, vector<3x1xf32>
    %25 = vector.broadcast %24 : vector<3x1xf32> to vector<3x1024xf32>
    %26 = arith.mulf %25, %23 : vector<3x1024xf32>
    %27 = arith.addf %22, %26 : vector<3x1024xf32>
    %c990_i32 = arith.constant 990 : i32
    %28 = tpu.dynamic_rotate %3 by %c990_i32 dim 1 : vector<3x1024xf32>, i32 -> vector<3x1024xf32>
    %c0_7 = arith.constant 0 : index
    %c5 = arith.constant 5 : index
    %29 = vector.load %arg1[%c0_7, %c5] : memref<3x27xf32, #tpu.memory_space<vmem>>, vector<3x1xf32>
    %30 = vector.broadcast %29 : vector<3x1xf32> to vector<3x1024xf32>
    %31 = arith.mulf %30, %28 : vector<3x1024xf32>
    %32 = arith.addf %27, %31 : vector<3x1024xf32>
    %c960_i32 = arith.constant 960 : i32
    %33 = tpu.dynamic_rotate %3 by %c960_i32 dim 1 : vector<3x1024xf32>, i32 -> vector<3x1024xf32>
    %c0_8 = arith.constant 0 : index
    %c6 = arith.constant 6 : index
    %34 = vector.load %arg1[%c0_8, %c6] : memref<3x27xf32, #tpu.memory_space<vmem>>, vector<3x1xf32>
    %35 = vector.broadcast %34 : vector<3x1xf32> to vector<3x1024xf32>
    %36 = arith.mulf %35, %33 : vector<3x1024xf32>
    %37 = arith.addf %32, %36 : vector<3x1024xf32>
    %c959_i32 = arith.constant 959 : i32
    %38 = tpu.dynamic_rotate %3 by %c959_i32 dim 1 : vector<3x1024xf32>, i32 -> vector<3x1024xf32>
    %c0_9 = arith.constant 0 : index
    %c7 = arith.constant 7 : index
    %39 = vector.load %arg1[%c0_9, %c7] : memref<3x27xf32, #tpu.memory_space<vmem>>, vector<3x1xf32>
    %40 = vector.broadcast %39 : vector<3x1xf32> to vector<3x1024xf32>
    %41 = arith.mulf %40, %38 : vector<3x1024xf32>
    %42 = arith.addf %37, %41 : vector<3x1024xf32>
    %c958_i32 = arith.constant 958 : i32
    %43 = tpu.dynamic_rotate %3 by %c958_i32 dim 1 : vector<3x1024xf32>, i32 -> vector<3x1024xf32>
    %c0_10 = arith.constant 0 : index
    %c8 = arith.constant 8 : index
    %44 = vector.load %arg1[%c0_10, %c8] : memref<3x27xf32, #tpu.memory_space<vmem>>, vector<3x1xf32>
    %45 = vector.broadcast %44 : vector<3x1xf32> to vector<3x1024xf32>
    %46 = arith.mulf %45, %43 : vector<3x1024xf32>
    %47 = arith.addf %42, %46 : vector<3x1024xf32>
    %c1_11 = arith.constant 1 : index
    %c0_12 = arith.constant 0 : index
    %48 = vector.load %arg0[%c1_11, %c0_12] : memref<6x1024xf32, #tpu.memory_space<vmem>>, vector<1x1024xf32>
    %49 = vector.shape_cast %48 : vector<1x1024xf32> to vector<1x1024xf32>
    %50 = vector.broadcast %49 : vector<1x1024xf32> to vector<3x1024xf32>
    %c0_13 = arith.constant 0 : index
    %c9 = arith.constant 9 : index
    %51 = vector.load %arg1[%c0_13, %c9] : memref<3x27xf32, #tpu.memory_space<vmem>>, vector<3x1xf32>
    %52 = vector.broadcast %51 : vector<3x1xf32> to vector<3x1024xf32>
    %53 = arith.mulf %52, %50 : vector<3x1024xf32>
    %54 = arith.addf %47, %53 : vector<3x1024xf32>
    %c1023_i32_14 = arith.constant 1023 : i32
    %55 = tpu.dynamic_rotate %50 by %c1023_i32_14 dim 1 : vector<3x1024xf32>, i32 -> vector<3x1024xf32>
    %c0_15 = arith.constant 0 : index
    %c10 = arith.constant 10 : index
    %56 = vector.load %arg1[%c0_15, %c10] : memref<3x27xf32, #tpu.memory_space<vmem>>, vector<3x1xf32>
    %57 = vector.broadcast %56 : vector<3x1xf32> to vector<3x1024xf32>
    %58 = arith.mulf %57, %55 : vector<3x1024xf32>
    %59 = arith.addf %54, %58 : vector<3x1024xf32>
    %c1022_i32_16 = arith.constant 1022 : i32
    %60 = tpu.dynamic_rotate %50 by %c1022_i32_16 dim 1 : vector<3x1024xf32>, i32 -> vector<3x1024xf32>
    %c0_17 = arith.constant 0 : index
    %c11 = arith.constant 11 : index
    %61 = vector.load %arg1[%c0_17, %c11] : memref<3x27xf32, #tpu.memory_space<vmem>>, vector<3x1xf32>
    %62 = vector.broadcast %61 : vector<3x1xf32> to vector<3x1024xf32>
    %63 = arith.mulf %62, %60 : vector<3x1024xf32>
    %64 = arith.addf %59, %63 : vector<3x1024xf32>
    %c992_i32_18 = arith.constant 992 : i32
    %65 = tpu.dynamic_rotate %50 by %c992_i32_18 dim 1 : vector<3x1024xf32>, i32 -> vector<3x1024xf32>
    %c0_19 = arith.constant 0 : index
    %c12 = arith.constant 12 : index
    %66 = vector.load %arg1[%c0_19, %c12] : memref<3x27xf32, #tpu.memory_space<vmem>>, vector<3x1xf32>
    %67 = vector.broadcast %66 : vector<3x1xf32> to vector<3x1024xf32>
    %68 = arith.mulf %67, %65 : vector<3x1024xf32>
    %69 = arith.addf %64, %68 : vector<3x1024xf32>
    %c991_i32_20 = arith.constant 991 : i32
    %70 = tpu.dynamic_rotate %50 by %c991_i32_20 dim 1 : vector<3x1024xf32>, i32 -> vector<3x1024xf32>
    %c0_21 = arith.constant 0 : index
    %c13 = arith.constant 13 : index
    %71 = vector.load %arg1[%c0_21, %c13] : memref<3x27xf32, #tpu.memory_space<vmem>>, vector<3x1xf32>
    %72 = vector.broadcast %71 : vector<3x1xf32> to vector<3x1024xf32>
    %73 = arith.mulf %72, %70 : vector<3x1024xf32>
    %74 = arith.addf %69, %73 : vector<3x1024xf32>
    %c990_i32_22 = arith.constant 990 : i32
    %75 = tpu.dynamic_rotate %50 by %c990_i32_22 dim 1 : vector<3x1024xf32>, i32 -> vector<3x1024xf32>
    %c0_23 = arith.constant 0 : index
    %c14 = arith.constant 14 : index
    %76 = vector.load %arg1[%c0_23, %c14] : memref<3x27xf32, #tpu.memory_space<vmem>>, vector<3x1xf32>
    %77 = vector.broadcast %76 : vector<3x1xf32> to vector<3x1024xf32>
    %78 = arith.mulf %77, %75 : vector<3x1024xf32>
    %79 = arith.addf %74, %78 : vector<3x1024xf32>
    %c960_i32_24 = arith.constant 960 : i32
    %80 = tpu.dynamic_rotate %50 by %c960_i32_24 dim 1 : vector<3x1024xf32>, i32 -> vector<3x1024xf32>
    %c0_25 = arith.constant 0 : index
    %c15 = arith.constant 15 : index
    %81 = vector.load %arg1[%c0_25, %c15] : memref<3x27xf32, #tpu.memory_space<vmem>>, vector<3x1xf32>
    %82 = vector.broadcast %81 : vector<3x1xf32> to vector<3x1024xf32>
    %83 = arith.mulf %82, %80 : vector<3x1024xf32>
    %84 = arith.addf %79, %83 : vector<3x1024xf32>
    %c959_i32_26 = arith.constant 959 : i32
    %85 = tpu.dynamic_rotate %50 by %c959_i32_26 dim 1 : vector<3x1024xf32>, i32 -> vector<3x1024xf32>
    %c0_27 = arith.constant 0 : index
    %c16 = arith.constant 16 : index
    %86 = vector.load %arg1[%c0_27, %c16] : memref<3x27xf32, #tpu.memory_space<vmem>>, vector<3x1xf32>
    %87 = vector.broadcast %86 : vector<3x1xf32> to vector<3x1024xf32>
    %88 = arith.mulf %87, %85 : vector<3x1024xf32>
    %89 = arith.addf %84, %88 : vector<3x1024xf32>
    %c958_i32_28 = arith.constant 958 : i32
    %90 = tpu.dynamic_rotate %50 by %c958_i32_28 dim 1 : vector<3x1024xf32>, i32 -> vector<3x1024xf32>
    %c0_29 = arith.constant 0 : index
    %c17 = arith.constant 17 : index
    %91 = vector.load %arg1[%c0_29, %c17] : memref<3x27xf32, #tpu.memory_space<vmem>>, vector<3x1xf32>
    %92 = vector.broadcast %91 : vector<3x1xf32> to vector<3x1024xf32>
    %93 = arith.mulf %92, %90 : vector<3x1024xf32>
    %94 = arith.addf %89, %93 : vector<3x1024xf32>
    %c2_30 = arith.constant 2 : index
    %c0_31 = arith.constant 0 : index
    %95 = vector.load %arg0[%c2_30, %c0_31] : memref<6x1024xf32, #tpu.memory_space<vmem>>, vector<1x1024xf32>
    %96 = vector.shape_cast %95 : vector<1x1024xf32> to vector<1x1024xf32>
    %97 = vector.broadcast %96 : vector<1x1024xf32> to vector<3x1024xf32>
    %c0_32 = arith.constant 0 : index
    %c18 = arith.constant 18 : index
    %98 = vector.load %arg1[%c0_32, %c18] : memref<3x27xf32, #tpu.memory_space<vmem>>, vector<3x1xf32>
    %99 = vector.broadcast %98 : vector<3x1xf32> to vector<3x1024xf32>
    %100 = arith.mulf %99, %97 : vector<3x1024xf32>
    %101 = arith.addf %94, %100 : vector<3x1024xf32>
    %c1023_i32_33 = arith.constant 1023 : i32
    %102 = tpu.dynamic_rotate %97 by %c1023_i32_33 dim 1 : vector<3x1024xf32>, i32 -> vector<3x1024xf32>
    %c0_34 = arith.constant 0 : index
    %c19 = arith.constant 19 : index
    %103 = vector.load %arg1[%c0_34, %c19] : memref<3x27xf32, #tpu.memory_space<vmem>>, vector<3x1xf32>
    %104 = vector.broadcast %103 : vector<3x1xf32> to vector<3x1024xf32>
    %105 = arith.mulf %104, %102 : vector<3x1024xf32>
    %106 = arith.addf %101, %105 : vector<3x1024xf32>
    %c1022_i32_35 = arith.constant 1022 : i32
    %107 = tpu.dynamic_rotate %97 by %c1022_i32_35 dim 1 : vector<3x1024xf32>, i32 -> vector<3x1024xf32>
    %c0_36 = arith.constant 0 : index
    %c20 = arith.constant 20 : index
    %108 = vector.load %arg1[%c0_36, %c20] : memref<3x27xf32, #tpu.memory_space<vmem>>, vector<3x1xf32>
    %109 = vector.broadcast %108 : vector<3x1xf32> to vector<3x1024xf32>
    %110 = arith.mulf %109, %107 : vector<3x1024xf32>
    %111 = arith.addf %106, %110 : vector<3x1024xf32>
    %c992_i32_37 = arith.constant 992 : i32
    %112 = tpu.dynamic_rotate %97 by %c992_i32_37 dim 1 : vector<3x1024xf32>, i32 -> vector<3x1024xf32>
    %c0_38 = arith.constant 0 : index
    %c21 = arith.constant 21 : index
    %113 = vector.load %arg1[%c0_38, %c21] : memref<3x27xf32, #tpu.memory_space<vmem>>, vector<3x1xf32>
    %114 = vector.broadcast %113 : vector<3x1xf32> to vector<3x1024xf32>
    %115 = arith.mulf %114, %112 : vector<3x1024xf32>
    %116 = arith.addf %111, %115 : vector<3x1024xf32>
    %c991_i32_39 = arith.constant 991 : i32
    %117 = tpu.dynamic_rotate %97 by %c991_i32_39 dim 1 : vector<3x1024xf32>, i32 -> vector<3x1024xf32>
    %c0_40 = arith.constant 0 : index
    %c22 = arith.constant 22 : index
    %118 = vector.load %arg1[%c0_40, %c22] : memref<3x27xf32, #tpu.memory_space<vmem>>, vector<3x1xf32>
    %119 = vector.broadcast %118 : vector<3x1xf32> to vector<3x1024xf32>
    %120 = arith.mulf %119, %117 : vector<3x1024xf32>
    %121 = arith.addf %116, %120 : vector<3x1024xf32>
    %c990_i32_41 = arith.constant 990 : i32
    %122 = tpu.dynamic_rotate %97 by %c990_i32_41 dim 1 : vector<3x1024xf32>, i32 -> vector<3x1024xf32>
    %c0_42 = arith.constant 0 : index
    %c23 = arith.constant 23 : index
    %123 = vector.load %arg1[%c0_42, %c23] : memref<3x27xf32, #tpu.memory_space<vmem>>, vector<3x1xf32>
    %124 = vector.broadcast %123 : vector<3x1xf32> to vector<3x1024xf32>
    %125 = arith.mulf %124, %122 : vector<3x1024xf32>
    %126 = arith.addf %121, %125 : vector<3x1024xf32>
    %c960_i32_43 = arith.constant 960 : i32
    %127 = tpu.dynamic_rotate %97 by %c960_i32_43 dim 1 : vector<3x1024xf32>, i32 -> vector<3x1024xf32>
    %c0_44 = arith.constant 0 : index
    %c24 = arith.constant 24 : index
    %128 = vector.load %arg1[%c0_44, %c24] : memref<3x27xf32, #tpu.memory_space<vmem>>, vector<3x1xf32>
    %129 = vector.broadcast %128 : vector<3x1xf32> to vector<3x1024xf32>
    %130 = arith.mulf %129, %127 : vector<3x1024xf32>
    %131 = arith.addf %126, %130 : vector<3x1024xf32>
    %c959_i32_45 = arith.constant 959 : i32
    %132 = tpu.dynamic_rotate %97 by %c959_i32_45 dim 1 : vector<3x1024xf32>, i32 -> vector<3x1024xf32>
    %c0_46 = arith.constant 0 : index
    %c25 = arith.constant 25 : index
    %133 = vector.load %arg1[%c0_46, %c25] : memref<3x27xf32, #tpu.memory_space<vmem>>, vector<3x1xf32>
    %134 = vector.broadcast %133 : vector<3x1xf32> to vector<3x1024xf32>
    %135 = arith.mulf %134, %132 : vector<3x1024xf32>
    %136 = arith.addf %131, %135 : vector<3x1024xf32>
    %c958_i32_47 = arith.constant 958 : i32
    %137 = tpu.dynamic_rotate %97 by %c958_i32_47 dim 1 : vector<3x1024xf32>, i32 -> vector<3x1024xf32>
    %c0_48 = arith.constant 0 : index
    %c26 = arith.constant 26 : index
    %138 = vector.load %arg1[%c0_48, %c26] : memref<3x27xf32, #tpu.memory_space<vmem>>, vector<3x1xf32>
    %139 = vector.broadcast %138 : vector<3x1xf32> to vector<3x1024xf32>
    %140 = arith.mulf %139, %137 : vector<3x1024xf32>
    %141 = arith.addf %136, %140 : vector<3x1024xf32>
    %c0_49 = arith.constant 0 : index
    %c0_50 = arith.constant 0 : index
    %142 = vector.load %arg2[%c0_49, %c0_50] : memref<3x1xf32, #tpu.memory_space<vmem>>, vector<3x1xf32>
    %143 = vector.broadcast %142 : vector<3x1xf32> to vector<3x1024xf32>
    %144 = arith.addf %141, %143 : vector<3x1024xf32>
    %cst_51 = arith.constant 0.000000e+00 : f32
    %145 = vector.broadcast %cst_51 : f32 to vector<3x1024xf32>
    %146 = arith.maximumf %144, %145 : vector<3x1024xf32>
    %c0_52 = arith.constant 0 : index
    %c0_53 = arith.constant 0 : index
    %c0_54 = arith.constant 0 : index
    %147 = vector.load %arg3[%c0_52, %c0_53, %c0_54] : memref<2x3x1024xf32, #tpu.memory_space<vmem>>, vector<1x3x1024xf32>
    %148 = vector.shape_cast %147 : vector<1x3x1024xf32> to vector<3x1024xf32>
    %149 = vector.shape_cast %146 : vector<3x1024xf32> to vector<1x3x1024xf32>
    tpu.vector_store %arg3[%c0_52, %c0_53, %c0_54], %149 {strides = array<i32>} : memref<2x3x1024xf32, #tpu.memory_space<vmem>>, vector<1x3x1024xf32>,
    %cst_55 = arith.constant 0.000000e+00 : f32
    %150 = vector.broadcast %cst_55 : f32 to vector<3x1024xf32>
    %c3_56 = arith.constant 3 : index
    %c0_57 = arith.constant 0 : index
    %151 = vector.load %arg0[%c3_56, %c0_57] : memref<6x1024xf32, #tpu.memory_space<vmem>>, vector<1x1024xf32>
    %152 = vector.shape_cast %151 : vector<1x1024xf32> to vector<1x1024xf32>
    %153 = vector.broadcast %152 : vector<1x1024xf32> to vector<3x1024xf32>
    %c0_58 = arith.constant 0 : index
    %c0_59 = arith.constant 0 : index
    %154 = vector.load %arg1[%c0_58, %c0_59] : memref<3x27xf32, #tpu.memory_space<vmem>>, vector<3x1xf32>
    %155 = vector.broadcast %154 : vector<3x1xf32> to vector<3x1024xf32>
    %156 = arith.mulf %155, %153 : vector<3x1024xf32>
    %157 = arith.addf %150, %156 : vector<3x1024xf32>
    %c1023_i32_60 = arith.constant 1023 : i32
    %158 = tpu.dynamic_rotate %153 by %c1023_i32_60 dim 1 : vector<3x1024xf32>, i32 -> vector<3x1024xf32>
    %c0_61 = arith.constant 0 : index
    %c1_62 = arith.constant 1 : index
    %159 = vector.load %arg1[%c0_61, %c1_62] : memref<3x27xf32, #tpu.memory_space<vmem>>, vector<3x1xf32>
    %160 = vector.broadcast %159 : vector<3x1xf32> to vector<3x1024xf32>
    %161 = arith.mulf %160, %158 : vector<3x1024xf32>
    %162 = arith.addf %157, %161 : vector<3x1024xf32>
    %c1022_i32_63 = arith.constant 1022 : i32
    %163 = tpu.dynamic_rotate %153 by %c1022_i32_63 dim 1 : vector<3x1024xf32>, i32 -> vector<3x1024xf32>
    %c0_64 = arith.constant 0 : index
    %c2_65 = arith.constant 2 : index
    %164 = vector.load %arg1[%c0_64, %c2_65] : memref<3x27xf32, #tpu.memory_space<vmem>>, vector<3x1xf32>
    %165 = vector.broadcast %164 : vector<3x1xf32> to vector<3x1024xf32>
    %166 = arith.mulf %165, %163 : vector<3x1024xf32>
    %167 = arith.addf %162, %166 : vector<3x1024xf32>
    %c992_i32_66 = arith.constant 992 : i32
    %168 = tpu.dynamic_rotate %153 by %c992_i32_66 dim 1 : vector<3x1024xf32>, i32 -> vector<3x1024xf32>
    %c0_67 = arith.constant 0 : index
    %c3_68 = arith.constant 3 : index
    %169 = vector.load %arg1[%c0_67, %c3_68] : memref<3x27xf32, #tpu.memory_space<vmem>>, vector<3x1xf32>
    %170 = vector.broadcast %169 : vector<3x1xf32> to vector<3x1024xf32>
    %171 = arith.mulf %170, %168 : vector<3x1024xf32>
    %172 = arith.addf %167, %171 : vector<3x1024xf32>
    %c991_i32_69 = arith.constant 991 : i32
    %173 = tpu.dynamic_rotate %153 by %c991_i32_69 dim 1 : vector<3x1024xf32>, i32 -> vector<3x1024xf32>
    %c0_70 = arith.constant 0 : index
    %c4_71 = arith.constant 4 : index
    %174 = vector.load %arg1[%c0_70, %c4_71] : memref<3x27xf32, #tpu.memory_space<vmem>>, vector<3x1xf32>
    %175 = vector.broadcast %174 : vector<3x1xf32> to vector<3x1024xf32>
    %176 = arith.mulf %175, %173 : vector<3x1024xf32>
    %177 = arith.addf %172, %176 : vector<3x1024xf32>
    %c990_i32_72 = arith.constant 990 : i32
    %178 = tpu.dynamic_rotate %153 by %c990_i32_72 dim 1 : vector<3x1024xf32>, i32 -> vector<3x1024xf32>
    %c0_73 = arith.constant 0 : index
    %c5_74 = arith.constant 5 : index
    %179 = vector.load %arg1[%c0_73, %c5_74] : memref<3x27xf32, #tpu.memory_space<vmem>>, vector<3x1xf32>
    %180 = vector.broadcast %179 : vector<3x1xf32> to vector<3x1024xf32>
    %181 = arith.mulf %180, %178 : vector<3x1024xf32>
    %182 = arith.addf %177, %181 : vector<3x1024xf32>
    %c960_i32_75 = arith.constant 960 : i32
    %183 = tpu.dynamic_rotate %153 by %c960_i32_75 dim 1 : vector<3x1024xf32>, i32 -> vector<3x1024xf32>
    %c0_76 = arith.constant 0 : index
    %c6_77 = arith.constant 6 : index
    %184 = vector.load %arg1[%c0_76, %c6_77] : memref<3x27xf32, #tpu.memory_space<vmem>>, vector<3x1xf32>
    %185 = vector.broadcast %184 : vector<3x1xf32> to vector<3x1024xf32>
    %186 = arith.mulf %185, %183 : vector<3x1024xf32>
    %187 = arith.addf %182, %186 : vector<3x1024xf32>
    %c959_i32_78 = arith.constant 959 : i32
    %188 = tpu.dynamic_rotate %153 by %c959_i32_78 dim 1 : vector<3x1024xf32>, i32 -> vector<3x1024xf32>
    %c0_79 = arith.constant 0 : index
    %c7_80 = arith.constant 7 : index
    %189 = vector.load %arg1[%c0_79, %c7_80] : memref<3x27xf32, #tpu.memory_space<vmem>>, vector<3x1xf32>
    %190 = vector.broadcast %189 : vector<3x1xf32> to vector<3x1024xf32>
    %191 = arith.mulf %190, %188 : vector<3x1024xf32>
    %192 = arith.addf %187, %191 : vector<3x1024xf32>
    %c958_i32_81 = arith.constant 958 : i32
    %193 = tpu.dynamic_rotate %153 by %c958_i32_81 dim 1 : vector<3x1024xf32>, i32 -> vector<3x1024xf32>
    %c0_82 = arith.constant 0 : index
    %c8_83 = arith.constant 8 : index
    %194 = vector.load %arg1[%c0_82, %c8_83] : memref<3x27xf32, #tpu.memory_space<vmem>>, vector<3x1xf32>
    %195 = vector.broadcast %194 : vector<3x1xf32> to vector<3x1024xf32>
    %196 = arith.mulf %195, %193 : vector<3x1024xf32>
    %197 = arith.addf %192, %196 : vector<3x1024xf32>
    %c4_84 = arith.constant 4 : index
    %c0_85 = arith.constant 0 : index
    %198 = vector.load %arg0[%c4_84, %c0_85] : memref<6x1024xf32, #tpu.memory_space<vmem>>, vector<1x1024xf32>
    %199 = vector.shape_cast %198 : vector<1x1024xf32> to vector<1x1024xf32>
    %200 = vector.broadcast %199 : vector<1x1024xf32> to vector<3x1024xf32>
    %c0_86 = arith.constant 0 : index
    %c9_87 = arith.constant 9 : index
    %201 = vector.load %arg1[%c0_86, %c9_87] : memref<3x27xf32, #tpu.memory_space<vmem>>, vector<3x1xf32>
    %202 = vector.broadcast %201 : vector<3x1xf32> to vector<3x1024xf32>
    %203 = arith.mulf %202, %200 : vector<3x1024xf32>
    %204 = arith.addf %197, %203 : vector<3x1024xf32>
    %c1023_i32_88 = arith.constant 1023 : i32
    %205 = tpu.dynamic_rotate %200 by %c1023_i32_88 dim 1 : vector<3x1024xf32>, i32 -> vector<3x1024xf32>
    %c0_89 = arith.constant 0 : index
    %c10_90 = arith.constant 10 : index
    %206 = vector.load %arg1[%c0_89, %c10_90] : memref<3x27xf32, #tpu.memory_space<vmem>>, vector<3x1xf32>
    %207 = vector.broadcast %206 : vector<3x1xf32> to vector<3x1024xf32>
    %208 = arith.mulf %207, %205 : vector<3x1024xf32>
    %209 = arith.addf %204, %208 : vector<3x1024xf32>
    %c1022_i32_91 = arith.constant 1022 : i32
    %210 = tpu.dynamic_rotate %200 by %c1022_i32_91 dim 1 : vector<3x1024xf32>, i32 -> vector<3x1024xf32>
    %c0_92 = arith.constant 0 : index
    %c11_93 = arith.constant 11 : index
    %211 = vector.load %arg1[%c0_92, %c11_93] : memref<3x27xf32, #tpu.memory_space<vmem>>, vector<3x1xf32>
    %212 = vector.broadcast %211 : vector<3x1xf32> to vector<3x1024xf32>
    %213 = arith.mulf %212, %210 : vector<3x1024xf32>
    %214 = arith.addf %209, %213 : vector<3x1024xf32>
    %c992_i32_94 = arith.constant 992 : i32
    %215 = tpu.dynamic_rotate %200 by %c992_i32_94 dim 1 : vector<3x1024xf32>, i32 -> vector<3x1024xf32>
    %c0_95 = arith.constant 0 : index
    %c12_96 = arith.constant 12 : index
    %216 = vector.load %arg1[%c0_95, %c12_96] : memref<3x27xf32, #tpu.memory_space<vmem>>, vector<3x1xf32>
    %217 = vector.broadcast %216 : vector<3x1xf32> to vector<3x1024xf32>
    %218 = arith.mulf %217, %215 : vector<3x1024xf32>
    %219 = arith.addf %214, %218 : vector<3x1024xf32>
    %c991_i32_97 = arith.constant 991 : i32
    %220 = tpu.dynamic_rotate %200 by %c991_i32_97 dim 1 : vector<3x1024xf32>, i32 -> vector<3x1024xf32>
    %c0_98 = arith.constant 0 : index
    %c13_99 = arith.constant 13 : index
    %221 = vector.load %arg1[%c0_98, %c13_99] : memref<3x27xf32, #tpu.memory_space<vmem>>, vector<3x1xf32>
    %222 = vector.broadcast %221 : vector<3x1xf32> to vector<3x1024xf32>
    %223 = arith.mulf %222, %220 : vector<3x1024xf32>
    %224 = arith.addf %219, %223 : vector<3x1024xf32>
    %c990_i32_100 = arith.constant 990 : i32
    %225 = tpu.dynamic_rotate %200 by %c990_i32_100 dim 1 : vector<3x1024xf32>, i32 -> vector<3x1024xf32>
    %c0_101 = arith.constant 0 : index
    %c14_102 = arith.constant 14 : index
    %226 = vector.load %arg1[%c0_101, %c14_102] : memref<3x27xf32, #tpu.memory_space<vmem>>, vector<3x1xf32>
    %227 = vector.broadcast %226 : vector<3x1xf32> to vector<3x1024xf32>
    %228 = arith.mulf %227, %225 : vector<3x1024xf32>
    %229 = arith.addf %224, %228 : vector<3x1024xf32>
    %c960_i32_103 = arith.constant 960 : i32
    %230 = tpu.dynamic_rotate %200 by %c960_i32_103 dim 1 : vector<3x1024xf32>, i32 -> vector<3x1024xf32>
    %c0_104 = arith.constant 0 : index
    %c15_105 = arith.constant 15 : index
    %231 = vector.load %arg1[%c0_104, %c15_105] : memref<3x27xf32, #tpu.memory_space<vmem>>, vector<3x1xf32>
    %232 = vector.broadcast %231 : vector<3x1xf32> to vector<3x1024xf32>
    %233 = arith.mulf %232, %230 : vector<3x1024xf32>
    %234 = arith.addf %229, %233 : vector<3x1024xf32>
    %c959_i32_106 = arith.constant 959 : i32
    %235 = tpu.dynamic_rotate %200 by %c959_i32_106 dim 1 : vector<3x1024xf32>, i32 -> vector<3x1024xf32>
    %c0_107 = arith.constant 0 : index
    %c16_108 = arith.constant 16 : index
    %236 = vector.load %arg1[%c0_107, %c16_108] : memref<3x27xf32, #tpu.memory_space<vmem>>, vector<3x1xf32>
    %237 = vector.broadcast %236 : vector<3x1xf32> to vector<3x1024xf32>
    %238 = arith.mulf %237, %235 : vector<3x1024xf32>
    %239 = arith.addf %234, %238 : vector<3x1024xf32>
    %c958_i32_109 = arith.constant 958 : i32
    %240 = tpu.dynamic_rotate %200 by %c958_i32_109 dim 1 : vector<3x1024xf32>, i32 -> vector<3x1024xf32>
    %c0_110 = arith.constant 0 : index
    %c17_111 = arith.constant 17 : index
    %241 = vector.load %arg1[%c0_110, %c17_111] : memref<3x27xf32, #tpu.memory_space<vmem>>, vector<3x1xf32>
    %242 = vector.broadcast %241 : vector<3x1xf32> to vector<3x1024xf32>
    %243 = arith.mulf %242, %240 : vector<3x1024xf32>
    %244 = arith.addf %239, %243 : vector<3x1024xf32>
    %c5_112 = arith.constant 5 : index
    %c0_113 = arith.constant 0 : index
    %245 = vector.load %arg0[%c5_112, %c0_113] : memref<6x1024xf32, #tpu.memory_space<vmem>>, vector<1x1024xf32>
    %246 = vector.shape_cast %245 : vector<1x1024xf32> to vector<1x1024xf32>
    %247 = vector.broadcast %246 : vector<1x1024xf32> to vector<3x1024xf32>
    %c0_114 = arith.constant 0 : index
    %c18_115 = arith.constant 18 : index
    %248 = vector.load %arg1[%c0_114, %c18_115] : memref<3x27xf32, #tpu.memory_space<vmem>>, vector<3x1xf32>
    %249 = vector.broadcast %248 : vector<3x1xf32> to vector<3x1024xf32>
    %250 = arith.mulf %249, %247 : vector<3x1024xf32>
    %251 = arith.addf %244, %250 : vector<3x1024xf32>
    %c1023_i32_116 = arith.constant 1023 : i32
    %252 = tpu.dynamic_rotate %247 by %c1023_i32_116 dim 1 : vector<3x1024xf32>, i32 -> vector<3x1024xf32>
    %c0_117 = arith.constant 0 : index
    %c19_118 = arith.constant 19 : index
    %253 = vector.load %arg1[%c0_117, %c19_118] : memref<3x27xf32, #tpu.memory_space<vmem>>, vector<3x1xf32>
    %254 = vector.broadcast %253 : vector<3x1xf32> to vector<3x1024xf32>
    %255 = arith.mulf %254, %252 : vector<3x1024xf32>
    %256 = arith.addf %251, %255 : vector<3x1024xf32>
    %c1022_i32_119 = arith.constant 1022 : i32
    %257 = tpu.dynamic_rotate %247 by %c1022_i32_119 dim 1 : vector<3x1024xf32>, i32 -> vector<3x1024xf32>
    %c0_120 = arith.constant 0 : index
    %c20_121 = arith.constant 20 : index
    %258 = vector.load %arg1[%c0_120, %c20_121] : memref<3x27xf32, #tpu.memory_space<vmem>>, vector<3x1xf32>
    %259 = vector.broadcast %258 : vector<3x1xf32> to vector<3x1024xf32>
    %260 = arith.mulf %259, %257 : vector<3x1024xf32>
    %261 = arith.addf %256, %260 : vector<3x1024xf32>
    %c992_i32_122 = arith.constant 992 : i32
    %262 = tpu.dynamic_rotate %247 by %c992_i32_122 dim 1 : vector<3x1024xf32>, i32 -> vector<3x1024xf32>
    %c0_123 = arith.constant 0 : index
    %c21_124 = arith.constant 21 : index
    %263 = vector.load %arg1[%c0_123, %c21_124] : memref<3x27xf32, #tpu.memory_space<vmem>>, vector<3x1xf32>
    %264 = vector.broadcast %263 : vector<3x1xf32> to vector<3x1024xf32>
    %265 = arith.mulf %264, %262 : vector<3x1024xf32>
    %266 = arith.addf %261, %265 : vector<3x1024xf32>
    %c991_i32_125 = arith.constant 991 : i32
    %267 = tpu.dynamic_rotate %247 by %c991_i32_125 dim 1 : vector<3x1024xf32>, i32 -> vector<3x1024xf32>
    %c0_126 = arith.constant 0 : index
    %c22_127 = arith.constant 22 : index
    %268 = vector.load %arg1[%c0_126, %c22_127] : memref<3x27xf32, #tpu.memory_space<vmem>>, vector<3x1xf32>
    %269 = vector.broadcast %268 : vector<3x1xf32> to vector<3x1024xf32>
    %270 = arith.mulf %269, %267 : vector<3x1024xf32>
    %271 = arith.addf %266, %270 : vector<3x1024xf32>
    %c990_i32_128 = arith.constant 990 : i32
    %272 = tpu.dynamic_rotate %247 by %c990_i32_128 dim 1 : vector<3x1024xf32>, i32 -> vector<3x1024xf32>
    %c0_129 = arith.constant 0 : index
    %c23_130 = arith.constant 23 : index
    %273 = vector.load %arg1[%c0_129, %c23_130] : memref<3x27xf32, #tpu.memory_space<vmem>>, vector<3x1xf32>
    %274 = vector.broadcast %273 : vector<3x1xf32> to vector<3x1024xf32>
    %275 = arith.mulf %274, %272 : vector<3x1024xf32>
    %276 = arith.addf %271, %275 : vector<3x1024xf32>
    %c960_i32_131 = arith.constant 960 : i32
    %277 = tpu.dynamic_rotate %247 by %c960_i32_131 dim 1 : vector<3x1024xf32>, i32 -> vector<3x1024xf32>
    %c0_132 = arith.constant 0 : index
    %c24_133 = arith.constant 24 : index
    %278 = vector.load %arg1[%c0_132, %c24_133] : memref<3x27xf32, #tpu.memory_space<vmem>>, vector<3x1xf32>
    %279 = vector.broadcast %278 : vector<3x1xf32> to vector<3x1024xf32>
    %280 = arith.mulf %279, %277 : vector<3x1024xf32>
    %281 = arith.addf %276, %280 : vector<3x1024xf32>
    %c959_i32_134 = arith.constant 959 : i32
    %282 = tpu.dynamic_rotate %247 by %c959_i32_134 dim 1 : vector<3x1024xf32>, i32 -> vector<3x1024xf32>
    %c0_135 = arith.constant 0 : index
    %c25_136 = arith.constant 25 : index
    %283 = vector.load %arg1[%c0_135, %c25_136] : memref<3x27xf32, #tpu.memory_space<vmem>>, vector<3x1xf32>
    %284 = vector.broadcast %283 : vector<3x1xf32> to vector<3x1024xf32>
    %285 = arith.mulf %284, %282 : vector<3x1024xf32>
    %286 = arith.addf %281, %285 : vector<3x1024xf32>
    %c958_i32_137 = arith.constant 958 : i32
    %287 = tpu.dynamic_rotate %247 by %c958_i32_137 dim 1 : vector<3x1024xf32>, i32 -> vector<3x1024xf32>
    %c0_138 = arith.constant 0 : index
    %c26_139 = arith.constant 26 : index
    %288 = vector.load %arg1[%c0_138, %c26_139] : memref<3x27xf32, #tpu.memory_space<vmem>>, vector<3x1xf32>
    %289 = vector.broadcast %288 : vector<3x1xf32> to vector<3x1024xf32>
    %290 = arith.mulf %289, %287 : vector<3x1024xf32>
    %291 = arith.addf %286, %290 : vector<3x1024xf32>
    %c0_140 = arith.constant 0 : index
    %c0_141 = arith.constant 0 : index
    %292 = vector.load %arg2[%c0_140, %c0_141] : memref<3x1xf32, #tpu.memory_space<vmem>>, vector<3x1xf32>
    %293 = vector.broadcast %292 : vector<3x1xf32> to vector<3x1024xf32>
    %294 = arith.addf %291, %293 : vector<3x1024xf32>
    %cst_142 = arith.constant 0.000000e+00 : f32
    %295 = vector.broadcast %cst_142 : f32 to vector<3x1024xf32>
    %296 = arith.maximumf %294, %295 : vector<3x1024xf32>
    %c1_143 = arith.constant 1 : index
    %c0_144 = arith.constant 0 : index
    %c0_145 = arith.constant 0 : index
    %297 = vector.load %arg3[%c1_143, %c0_144, %c0_145] : memref<2x3x1024xf32, #tpu.memory_space<vmem>>, vector<1x3x1024xf32>
    %298 = vector.shape_cast %297 : vector<1x3x1024xf32> to vector<3x1024xf32>
    %299 = vector.shape_cast %296 : vector<3x1024xf32> to vector<1x3x1024xf32>
    tpu.vector_store %arg3[%c1_143, %c0_144, %c0_145], %299 {strides = array<i32>} : memref<2x3x1024xf32, #tpu.memory_space<vmem>>, vector<1x3x1024xf32>,
    return
  }
}

</mosaic_0001>

<llo_original>
// kernel: tpu_custom_call.1
$region0: #{tpu_custom_call.1}
  #allocation0 [shape = 'u32[]', space=smem, size = 0x4, offset = 0x4, fixed_abs, tag = 'smem constant byte address 0x4 - core index']
  #allocation1 [shape = 'u32[144,128]{1,0:T(1,128)}', space=vmem, size = 0x12000, scoped, tag = 'internal scratch']
  %s0 = inlined_call_operand.hbm [shape: f32[6,1024], index: 0, kind: input, shape index: {}]
  %s1 = inlined_call_operand.vmem [shape: f32[3,27], index: 1, kind: input, shape index: {}]
  %s2 = inlined_call_operand.vmem [shape: f32[3,1], index: 2, kind: input, shape index: {}]
  %s3 = inlined_call_operand.vmem [shape: f32[2,3,1024], index: 3, kind: output, shape index: {}]
  %s4 = sld [smem:[#allocation0]]
  $region26: #{tpu_custom_call.1} parent=0
    _
  %s6 = ssub.s32 1, %s4
  %s7 = scalar_select 0, %s6, %s4
  $region1: #{tpu_custom_call.1} parent=0
    #allocation2 [shape = 'u8[32768]{0}', space=vmem, size = 0x8000, scoped, tag = 'input window, operand 0, single buffered']
    #allocation3 [shape = 's32[1]{0}', space=sflag, size = 0x4, scoped, tag = 'scoped memory for tpu_custom_call.1']
    %8 = vsyncpa [#allocation3], 0
    // Predicated region
    $region2: #{tpu_custom_call.1} parent=1 // pred_check
      _
    $region3: #{tpu_custom_call.1} parent=1 // pred_check_branch
      %10 = sbr.rel (0) target = $region5
    $region4: #{tpu_custom_call.1} parent=1 // pred_region
      %s12 = ssub.s32 1024, 1024
      %13 = vsyncadd [#allocation3], %s12
      %s15 = sshll.u32 [#allocation2], 4
      %s16 = int_to_ptr.vmem [resolvable:$true] %s15
      %18 = dma.hbm_to_vmem [thread:$0]  %s0, 1024, %s16, [#allocation3]
    $region5: #{tpu_custom_call.1} parent=1 // pred_fallthru
      _
    // Predicated region
    $region6: #{tpu_custom_call.1} parent=1 // pred_check
      _
    $region7: #{tpu_custom_call.1} parent=1 // pred_check_branch
      %20 = sbr.rel (0) target = $region9
    $region8: #{tpu_custom_call.1} parent=1 // pred_region
      _
    $region9: #{tpu_custom_call.1} parent=1 // pred_fallthru
      _
    // Predicated region
    $region10: #{tpu_custom_call.1} parent=1 // pred_check
      _
    $region11: #{tpu_custom_call.1} parent=1 // pred_check_branch
      %22 = sbr.rel (0) target = $region13
    $region12: #{tpu_custom_call.1} parent=1 // pred_region
      _
    $region13: #{tpu_custom_call.1} parent=1 // pred_fallthru
      _
    // Predicated region
    $region14: #{tpu_custom_call.1} parent=1 // pred_check
      _
    $region15: #{tpu_custom_call.1} parent=1 // pred_check_branch
      %24 = sbr.rel (0) target = $region17
    $region16: #{tpu_custom_call.1} parent=1 // pred_region
      %25 = dma.done [#allocation3], 1024
    $region17: #{tpu_custom_call.1} parent=1 // pred_fallthru
      _
    %v26 = vld [vmem:[#allocation2] ss:$8 sm:$0xf]
    %v27 = vld [vmem:[#allocation2] ss:$8 sm:$0xf0]
    %v28 = vor.u32 %v26, %v27
    %v30 = vlaneseq
    %v31 = vshrl.u32 %v30, 7
    %v32 = vsub.s32 0, %v31
    %v33 = vrot.slane %v28, %v32
    %v34 = vlaneseq
    %v35 = vshrl.u32 %v34, 7
    %v36 = vsub.s32 1, %v35
    %v37 = vrot.slane %v28, %v36
    %v38 = vlaneseq
    %v39 = vshrl.u32 %v38, 7
    %v40 = vsub.s32 2, %v39
    %v41 = vrot.slane %v28, %v40
    %v42 = vlaneseq
    %v43 = vshrl.u32 %v42, 7
    %v44 = vsub.s32 3, %v43
    %v45 = vrot.slane %v28, %v44
    %v46 = vlaneseq
    %v47 = vshrl.u32 %v46, 7
    %v48 = vsub.s32 4, %v47
    %v49 = vrot.slane %v28, %v48
    %v50 = vlaneseq
    %v51 = vshrl.u32 %v50, 7
    %v52 = vsub.s32 5, %v51
    %v53 = vrot.slane %v28, %v52
    %v54 = vlaneseq
    %v55 = vshrl.u32 %v54, 7
    %v56 = vsub.s32 6, %v55
    %v57 = vrot.slane %v28, %v56
    %v58 = vlaneseq
    %v59 = vshrl.u32 %v58, 7
    %v60 = vsub.s32 7, %v59
    %v61 = vrot.slane %v28, %v60
    %v70 = vld [vmem:[%s1] sm:$0x7]
    %72 = vset.pattern.permute.xlu0 0
    %73 = vperm.xlu0 %72, %v70
    %v74 = vpop.permute.xlu0 %73
    %v76 = vmul.f32 %v74, %v33
    %v77 = vmul.f32 %v74, %v37
    %v78 = vmul.f32 %v74, %v41
    %v79 = vmul.f32 %v74, %v45
    %v80 = vmul.f32 %v74, %v49
    %v81 = vmul.f32 %v74, %v53
    %v82 = vmul.f32 %v74, %v57
    %v83 = vmul.f32 %v74, %v61
    %v84 = vadd.f32 %v76, 0.0
    %v85 = vadd.f32 %v77, 0.0
    %v86 = vadd.f32 %v78, 0.0
    %v87 = vadd.f32 %v79, 0.0
    %v88 = vadd.f32 %v80, 0.0
    %v89 = vadd.f32 %v81, 0.0
    %v90 = vadd.f32 %v82, 0.0
    %v91 = vadd.f32 %v83, 0.0
    %92 = vrot.lane.b32.xlu0 %v33, 127
    %v93 = vpop.permute.xlu0 %92
    %94 = vrot.lane.b32.xlu0 %v37, 127
    %v95 = vpop.permute.xlu0 %94
    %96 = vrot.lane.b32.xlu0 %v41, 127
    %v97 = vpop.permute.xlu0 %96
    %98 = vrot.lane.b32.xlu0 %v45, 127
    %v99 = vpop.permute.xlu0 %98
    %100 = vrot.lane.b32.xlu0 %v49, 127
    %v101 = vpop.permute.xlu0 %100
    %102 = vrot.lane.b32.xlu0 %v53, 127
    %v103 = vpop.permute.xlu0 %102
    %104 = vrot.lane.b32.xlu0 %v57, 127
    %v105 = vpop.permute.xlu0 %104
    %106 = vrot.lane.b32.xlu0 %v61, 127
    %v107 = vpop.permute.xlu0 %106
    %v108 = vlaneseq
    %v109 = vand.u32 %v108, 127
    %vm110 = vcmp.lt.s32.totalorder %v109, 127
    %v111 = vsel %vm110, %v105, %v107
    %v112 = vsel %vm110, %v103, %v105
    %v113 = vsel %vm110, %v101, %v103
    %v114 = vsel %vm110, %v99, %v101
    %v115 = vsel %vm110, %v97, %v99
    %v116 = vsel %vm110, %v95, %v97
    %v117 = vsel %vm110, %v93, %v95
    %v118 = vsel %vm110, %v107, %v93
    %119 = vset.pattern.permute.xlu0 1
    %120 = vperm.xlu0 %119, %v70
    %v121 = vpop.permute.xlu0 %120
    %v123 = vmul.f32 %v121, %v117
    %v124 = vmul.f32 %v121, %v116
    %v125 = vmul.f32 %v121, %v115
    %v126 = vmul.f32 %v121, %v114
    %v127 = vmul.f32 %v121, %v113
    %v128 = vmul.f32 %v121, %v112
    %v129 = vmul.f32 %v121, %v111
    %v130 = vmul.f32 %v121, %v118
    %v131 = vadd.f32 %v84, %v123
    %v132 = vadd.f32 %v85, %v124
    %v133 = vadd.f32 %v86, %v125
    %v134 = vadd.f32 %v87, %v126
    %v135 = vadd.f32 %v88, %v127
    %v136 = vadd.f32 %v89, %v128
    %v137 = vadd.f32 %v90, %v129
    %v138 = vadd.f32 %v91, %v130
    %139 = vrot.lane.b32.xlu0 %v33, 126
    %v140 = vpop.permute.xlu0 %139
    %141 = vrot.lane.b32.xlu0 %v37, 126
    %v142 = vpop.permute.xlu0 %141
    %143 = vrot.lane.b32.xlu0 %v41, 126
    %v144 = vpop.permute.xlu0 %143
    %145 = vrot.lane.b32.xlu0 %v45, 126
    %v146 = vpop.permute.xlu0 %145
    %147 = vrot.lane.b32.xlu0 %v49, 126
    %v148 = vpop.permute.xlu0 %147
    %149 = vrot.lane.b32.xlu0 %v53, 126
    %v150 = vpop.permute.xlu0 %149
    %151 = vrot.lane.b32.xlu0 %v57, 126
    %v152 = vpop.permute.xlu0 %151
    %153 = vrot.lane.b32.xlu0 %v61, 126
    %v154 = vpop.permute.xlu0 %153
    %vm155 = vcmp.lt.s32.totalorder %v109, 126
    %v156 = vsel %vm155, %v152, %v154
    %v157 = vsel %vm155, %v150, %v152
    %v158 = vsel %vm155, %v148, %v150
    %v159 = vsel %vm155, %v146, %v148
    %v160 = vsel %vm155, %v144, %v146
    %v161 = vsel %vm155, %v142, %v144
    %v162 = vsel %vm155, %v140, %v142
    %v163 = vsel %vm155, %v154, %v140
    %164 = vset.pattern.permute.xlu0 2
    %165 = vperm.xlu0 %164, %v70
    %v166 = vpop.permute.xlu0 %165
    %v168 = vmul.f32 %v166, %v162
    %v169 = vmul.f32 %v166, %v161
    %v170 = vmul.f32 %v166, %v160
    %v171 = vmul.f32 %v166, %v159
    %v172 = vmul.f32 %v166, %v158
    %v173 = vmul.f32 %v166, %v157
    %v174 = vmul.f32 %v166, %v156
    %v175 = vmul.f32 %v166, %v163
    %v176 = vadd.f32 %v131, %v168
    %v177 = vadd.f32 %v132, %v169
    %v178 = vadd.f32 %v133, %v170
    %v179 = vadd.f32 %v134, %v171
    %v180 = vadd.f32 %v135, %v172
    %v181 = vadd.f32 %v136, %v173
    %v182 = vadd.f32 %v137, %v174
    %v183 = vadd.f32 %v138, %v175
    %184 = vrot.lane.b32.xlu0 %v33, 96
    %v185 = vpop.permute.xlu0 %184
    %186 = vrot.lane.b32.xlu0 %v37, 96
    %v187 = vpop.permute.xlu0 %186
    %188 = vrot.lane.b32.xlu0 %v41, 96
    %v189 = vpop.permute.xlu0 %188
    %190 = vrot.lane.b32.xlu0 %v45, 96
    %v191 = vpop.permute.xlu0 %190
    %192 = vrot.lane.b32.xlu0 %v49, 96
    %v193 = vpop.permute.xlu0 %192
    %194 = vrot.lane.b32.xlu0 %v53, 96
    %v195 = vpop.permute.xlu0 %194
    %196 = vrot.lane.b32.xlu0 %v57, 96
    %v197 = vpop.permute.xlu0 %196
    %198 = vrot.lane.b32.xlu0 %v61, 96
    %v199 = vpop.permute.xlu0 %198
    %vm200 = vcmp.lt.s32.totalorder %v109, 96
    %v201 = vsel %vm200, %v197, %v199
    %v202 = vsel %vm200, %v195, %v197
    %v203 = vsel %vm200, %v193, %v195
    %v204 = vsel %vm200, %v191, %v193
    %v205 = vsel %vm200, %v189, %v191
    %v206 = vsel %vm200, %v187, %v189
    %v207 = vsel %vm200, %v185, %v187
    %v208 = vsel %vm200, %v199, %v185
    %209 = vset.pattern.permute.xlu0 3
    %210 = vperm.xlu0 %209, %v70
    %v211 = vpop.permute.xlu0 %210
    %v213 = vmul.f32 %v211, %v207
    %v214 = vmul.f32 %v211, %v206
    %v215 = vmul.f32 %v211, %v205
    %v216 = vmul.f32 %v211, %v204
    %v217 = vmul.f32 %v211, %v203
    %v218 = vmul.f32 %v211, %v202
    %v219 = vmul.f32 %v211, %v201
    %v220 = vmul.f32 %v211, %v208
    %v221 = vadd.f32 %v176, %v213
    %v222 = vadd.f32 %v177, %v214
    %v223 = vadd.f32 %v178, %v215
    %v224 = vadd.f32 %v179, %v216
    %v225 = vadd.f32 %v180, %v217
    %v226 = vadd.f32 %v181, %v218
    %v227 = vadd.f32 %v182, %v219
    %v228 = vadd.f32 %v183, %v220
    %229 = vrot.lane.b32.xlu0 %v33, 95
    %v230 = vpop.permute.xlu0 %229
    %231 = vrot.lane.b32.xlu0 %v37, 95
    %v232 = vpop.permute.xlu0 %231
    %233 = vrot.lane.b32.xlu0 %v41, 95
    %v234 = vpop.permute.xlu0 %233
    %235 = vrot.lane.b32.xlu0 %v45, 95
    %v236 = vpop.permute.xlu0 %235
    %237 = vrot.lane.b32.xlu0 %v49, 95
    %v238 = vpop.permute.xlu0 %237
    %239 = vrot.lane.b32.xlu0 %v53, 95
    %v240 = vpop.permute.xlu0 %239
    %241 = vrot.lane.b32.xlu0 %v57, 95
    %v242 = vpop.permute.xlu0 %241
    %243 = vrot.lane.b32.xlu0 %v61, 95
    %v244 = vpop.permute.xlu0 %243
    %vm245 = vcmp.lt.s32.totalorder %v109, 95
    %v246 = vsel %vm245, %v242, %v244
    %v247 = vsel %vm245, %v240, %v242
    %v248 = vsel %vm245, %v238, %v240
    %v249 = vsel %vm245, %v236, %v238
    %v250 = vsel %vm245, %v234, %v236
    %v251 = vsel %vm245, %v232, %v234
    %v252 = vsel %vm245, %v230, %v232
    %v253 = vsel %vm245, %v244, %v230
    %254 = vset.pattern.permute.xlu0 4
    %255 = vperm.xlu0 %254, %v70
    %v256 = vpop.permute.xlu0 %255
    %v258 = vmul.f32 %v256, %v252
    %v259 = vmul.f32 %v256, %v251
    %v260 = vmul.f32 %v256, %v250
    %v261 = vmul.f32 %v256, %v249
    %v262 = vmul.f32 %v256, %v248
    %v263 = vmul.f32 %v256, %v247
    %v264 = vmul.f32 %v256, %v246
    %v265 = vmul.f32 %v256, %v253
    %v266 = vadd.f32 %v221, %v258
    %v267 = vadd.f32 %v222, %v259
    %v268 = vadd.f32 %v223, %v260
    %v269 = vadd.f32 %v224, %v261
    %v270 = vadd.f32 %v225, %v262
    %v271 = vadd.f32 %v226, %v263
    %v272 = vadd.f32 %v227, %v264
    %v273 = vadd.f32 %v228, %v265
    %274 = vrot.lane.b32.xlu0 %v33, 94
    %v275 = vpop.permute.xlu0 %274
    %276 = vrot.lane.b32.xlu0 %v37, 94
    %v277 = vpop.permute.xlu0 %276
    %278 = vrot.lane.b32.xlu0 %v41, 94
    %v279 = vpop.permute.xlu0 %278
    %280 = vrot.lane.b32.xlu0 %v45, 94
    %v281 = vpop.permute.xlu0 %280
    %282 = vrot.lane.b32.xlu0 %v49, 94
    %v283 = vpop.permute.xlu0 %282
    %284 = vrot.lane.b32.xlu0 %v53, 94
    %v285 = vpop.permute.xlu0 %284
    %286 = vrot.lane.b32.xlu0 %v57, 94
    %v287 = vpop.permute.xlu0 %286
    %288 = vrot.lane.b32.xlu0 %v61, 94
    %v289 = vpop.permute.xlu0 %288
    %vm290 = vcmp.lt.s32.totalorder %v109, 94
    %v291 = vsel %vm290, %v287, %v289
    %v292 = vsel %vm290, %v285, %v287
    %v293 = vsel %vm290, %v283, %v285
    %v294 = vsel %vm290, %v281, %v283
    %v295 = vsel %vm290, %v279, %v281
    %v296 = vsel %vm290, %v277, %v279
    %v297 = vsel %vm290, %v275, %v277
    %v298 = vsel %vm290, %v289, %v275
    %299 = vset.pattern.permute.xlu0 5
    %300 = vperm.xlu0 %299, %v70
    %v301 = vpop.permute.xlu0 %300
    %v303 = vmul.f32 %v301, %v297
    %v304 = vmul.f32 %v301, %v296
    %v305 = vmul.f32 %v301, %v295
    %v306 = vmul.f32 %v301, %v294
    %v307 = vmul.f32 %v301, %v293
    %v308 = vmul.f32 %v301, %v292
    %v309 = vmul.f32 %v301, %v291
    %v310 = vmul.f32 %v301, %v298
    %v311 = vadd.f32 %v266, %v303
    %v312 = vadd.f32 %v267, %v304
    %v313 = vadd.f32 %v268, %v305
    %v314 = vadd.f32 %v269, %v306
    %v315 = vadd.f32 %v270, %v307
    %v316 = vadd.f32 %v271, %v308
    %v317 = vadd.f32 %v272, %v309
    %v318 = vadd.f32 %v273, %v310
    %319 = vrot.lane.b32.xlu0 %v33, 64
    %v320 = vpop.permute.xlu0 %319
    %321 = vrot.lane.b32.xlu0 %v37, 64
    %v322 = vpop.permute.xlu0 %321
    %323 = vrot.lane.b32.xlu0 %v41, 64
    %v324 = vpop.permute.xlu0 %323
    %325 = vrot.lane.b32.xlu0 %v45, 64
    %v326 = vpop.permute.xlu0 %325
    %327 = vrot.lane.b32.xlu0 %v49, 64
    %v328 = vpop.permute.xlu0 %327
    %329 = vrot.lane.b32.xlu0 %v53, 64
    %v330 = vpop.permute.xlu0 %329
    %331 = vrot.lane.b32.xlu0 %v57, 64
    %v332 = vpop.permute.xlu0 %331
    %333 = vrot.lane.b32.xlu0 %v61, 64
    %v334 = vpop.permute.xlu0 %333
    %vm335 = vcmp.lt.s32.totalorder %v109, 64
    %v336 = vsel %vm335, %v332, %v334
    %v337 = vsel %vm335, %v330, %v332
    %v338 = vsel %vm335, %v328, %v330
    %v339 = vsel %vm335, %v326, %v328
    %v340 = vsel %vm335, %v324, %v326
    %v341 = vsel %vm335, %v322, %v324
    %v342 = vsel %vm335, %v320, %v322
    %v343 = vsel %vm335, %v334, %v320
    %344 = vset.pattern.permute.xlu0 6
    %345 = vperm.xlu0 %344, %v70
    %v346 = vpop.permute.xlu0 %345
    %v348 = vmul.f32 %v346, %v342
    %v349 = vmul.f32 %v346, %v341
    %v350 = vmul.f32 %v346, %v340
    %v351 = vmul.f32 %v346, %v339
    %v352 = vmul.f32 %v346, %v338
    %v353 = vmul.f32 %v346, %v337
    %v354 = vmul.f32 %v346, %v336
    %v355 = vmul.f32 %v346, %v343
    %v356 = vadd.f32 %v311, %v348
    %v357 = vadd.f32 %v312, %v349
    %v358 = vadd.f32 %v313, %v350
    %v359 = vadd.f32 %v314, %v351
    %v360 = vadd.f32 %v315, %v352
    %v361 = vadd.f32 %v316, %v353
    %v362 = vadd.f32 %v317, %v354
    %v363 = vadd.f32 %v318, %v355
    %364 = vrot.lane.b32.xlu0 %v33, 63
    %v365 = vpop.permute.xlu0 %364
    %366 = vrot.lane.b32.xlu0 %v37, 63
    %v367 = vpop.permute.xlu0 %366
    %368 = vrot.lane.b32.xlu0 %v41, 63
    %v369 = vpop.permute.xlu0 %368
    %370 = vrot.lane.b32.xlu0 %v45, 63
    %v371 = vpop.permute.xlu0 %370
    %372 = vrot.lane.b32.xlu0 %v49, 63
    %v373 = vpop.permute.xlu0 %372
    %374 = vrot.lane.b32.xlu0 %v53, 63
    %v375 = vpop.permute.xlu0 %374
    %376 = vrot.lane.b32.xlu0 %v57, 63
    %v377 = vpop.permute.xlu0 %376
    %378 = vrot.lane.b32.xlu0 %v61, 63
    %v379 = vpop.permute.xlu0 %378
    %vm380 = vcmp.lt.s32.totalorder %v109, 63
    %v381 = vsel %vm380, %v377, %v379
    %v382 = vsel %vm380, %v375, %v377
    %v383 = vsel %vm380, %v373, %v375
    %v384 = vsel %vm380, %v371, %v373
    %v385 = vsel %vm380, %v369, %v371
    %v386 = vsel %vm380, %v367, %v369
    %v387 = vsel %vm380, %v365, %v367
    %v388 = vsel %vm380, %v379, %v365
    %389 = vset.pattern.permute.xlu0 7
    %390 = vperm.xlu0 %389, %v70
    %v391 = vpop.permute.xlu0 %390
    %v393 = vmul.f32 %v391, %v387
    %v394 = vmul.f32 %v391, %v386
    %v395 = vmul.f32 %v391, %v385
    %v396 = vmul.f32 %v391, %v384
    %v397 = vmul.f32 %v391, %v383
    %v398 = vmul.f32 %v391, %v382
    %v399 = vmul.f32 %v391, %v381
    %v400 = vmul.f32 %v391, %v388
    %v401 = vadd.f32 %v356, %v393
    %v402 = vadd.f32 %v357, %v394
    %v403 = vadd.f32 %v358, %v395
    %v404 = vadd.f32 %v359, %v396
    %v405 = vadd.f32 %v360, %v397
    %v406 = vadd.f32 %v361, %v398
    %v407 = vadd.f32 %v362, %v399
    %v408 = vadd.f32 %v363, %v400
    %409 = vrot.lane.b32.xlu0 %v33, 62
    %v410 = vpop.permute.xlu0 %409
    %411 = vrot.lane.b32.xlu0 %v37, 62
    %v412 = vpop.permute.xlu0 %411
    %413 = vrot.lane.b32.xlu0 %v41, 62
    %v414 = vpop.permute.xlu0 %413
    %415 = vrot.lane.b32.xlu0 %v45, 62
    %v416 = vpop.permute.xlu0 %415
    %417 = vrot.lane.b32.xlu0 %v49, 62
    %v418 = vpop.permute.xlu0 %417
    %419 = vrot.lane.b32.xlu0 %v53, 62
    %v420 = vpop.permute.xlu0 %419
    %421 = vrot.lane.b32.xlu0 %v57, 62
    %v422 = vpop.permute.xlu0 %421
    %423 = vrot.lane.b32.xlu0 %v61, 62
    %v424 = vpop.permute.xlu0 %423
    %vm425 = vcmp.lt.s32.totalorder %v109, 62
    %v426 = vsel %vm425, %v422, %v424
    %v427 = vsel %vm425, %v420, %v422
    %v428 = vsel %vm425, %v418, %v420
    %v429 = vsel %vm425, %v416, %v418
    %v430 = vsel %vm425, %v414, %v416
    %v431 = vsel %vm425, %v412, %v414
    %v432 = vsel %vm425, %v410, %v412
    %v433 = vsel %vm425, %v424, %v410
    %434 = vset.pattern.permute.xlu0 8
    %435 = vperm.xlu0 %434, %v70
    %v436 = vpop.permute.xlu0 %435
    %v438 = vmul.f32 %v436, %v432
    %v439 = vmul.f32 %v436, %v431
    %v440 = vmul.f32 %v436, %v430
    %v441 = vmul.f32 %v436, %v429
    %v442 = vmul.f32 %v436, %v428
    %v443 = vmul.f32 %v436, %v427
    %v444 = vmul.f32 %v436, %v426
    %v445 = vmul.f32 %v436, %v433
    %v446 = vadd.f32 %v401, %v438
    %v447 = vadd.f32 %v402, %v439
    %v448 = vadd.f32 %v403, %v440
    %v449 = vadd.f32 %v404, %v441
    %v450 = vadd.f32 %v405, %v442
    %v451 = vadd.f32 %v406, %v443
    %v452 = vadd.f32 %v407, %v444
    %v453 = vadd.f32 %v408, %v445
    %s454 = scalar_lea.vmem [#allocation2], 1
    %v455 = vld [vmem:[%s454] ss:$8 sm:$0xf]
    %v456 = vld [vmem:[%s454] ss:$8 sm:$0xf0]
    %v457 = vor.u32 %v455, %v456
    %v459 = vlaneseq
    %v460 = vshrl.u32 %v459, 7
    %v461 = vsub.s32 0, %v460
    %v462 = vrot.slane %v457, %v461
    %v463 = vlaneseq
    %v464 = vshrl.u32 %v463, 7
    %v465 = vsub.s32 1, %v464
    %v466 = vrot.slane %v457, %v465
    %v467 = vlaneseq
    %v468 = vshrl.u32 %v467, 7
    %v469 = vsub.s32 2, %v468
    %v470 = vrot.slane %v457, %v469
    %v471 = vlaneseq
    %v472 = vshrl.u32 %v471, 7
    %v473 = vsub.s32 3, %v472
    %v474 = vrot.slane %v457, %v473
    %v475 = vlaneseq
    %v476 = vshrl.u32 %v475, 7
    %v477 = vsub.s32 4, %v476
    %v478 = vrot.slane %v457, %v477
    %v479 = vlaneseq
    %v480 = vshrl.u32 %v479, 7
    %v481 = vsub.s32 5, %v480
    %v482 = vrot.slane %v457, %v481
    %v483 = vlaneseq
    %v484 = vshrl.u32 %v483, 7
    %v485 = vsub.s32 6, %v484
    %v486 = vrot.slane %v457, %v485
    %v487 = vlaneseq
    %v488 = vshrl.u32 %v487, 7
    %v489 = vsub.s32 7, %v488
    %v490 = vrot.slane %v457, %v489
    %499 = vset.pattern.permute.xlu0 9
    %500 = vperm.xlu0 %499, %v70
    %v501 = vpop.permute.xlu0 %500
    %v503 = vmul.f32 %v501, %v462
    %v504 = vmul.f32 %v501, %v466
    %v505 = vmul.f32 %v501, %v470
    %v506 = vmul.f32 %v501, %v474
    %v507 = vmul.f32 %v501, %v478
    %v508 = vmul.f32 %v501, %v482
    %v509 = vmul.f32 %v501, %v486
    %v510 = vmul.f32 %v501, %v490
    %v511 = vadd.f32 %v446, %v503
    %v512 = vadd.f32 %v447, %v504
    %v513 = vadd.f32 %v448, %v505
    %v514 = vadd.f32 %v449, %v506
    %v515 = vadd.f32 %v450, %v507
    %v516 = vadd.f32 %v451, %v508
    %v517 = vadd.f32 %v452, %v509
    %v518 = vadd.f32 %v453, %v510
    %519 = vrot.lane.b32.xlu0 %v462, 127
    %v520 = vpop.permute.xlu0 %519
    %521 = vrot.lane.b32.xlu0 %v466, 127
    %v522 = vpop.permute.xlu0 %521
    %523 = vrot.lane.b32.xlu0 %v470, 127
    %v524 = vpop.permute.xlu0 %523
    %525 = vrot.lane.b32.xlu0 %v474, 127
    %v526 = vpop.permute.xlu0 %525
    %527 = vrot.lane.b32.xlu0 %v478, 127
    %v528 = vpop.permute.xlu0 %527
    %529 = vrot.lane.b32.xlu0 %v482, 127
    %v530 = vpop.permute.xlu0 %529
    %531 = vrot.lane.b32.xlu0 %v486, 127
    %v532 = vpop.permute.xlu0 %531
    %533 = vrot.lane.b32.xlu0 %v490, 127
    %v534 = vpop.permute.xlu0 %533
    %v535 = vsel %vm110, %v532, %v534
    %v536 = vsel %vm110, %v530, %v532
    %v537 = vsel %vm110, %v528, %v530
    %v538 = vsel %vm110, %v526, %v528
    %v539 = vsel %vm110, %v524, %v526
    %v540 = vsel %vm110, %v522, %v524
    %v541 = vsel %vm110, %v520, %v522
    %v542 = vsel %vm110, %v534, %v520
    %543 = vset.pattern.permute.xlu0 10
    %544 = vperm.xlu0 %543, %v70
    %v545 = vpop.permute.xlu0 %544
    %v547 = vmul.f32 %v545, %v541
    %v548 = vmul.f32 %v545, %v540
    %v549 = vmul.f32 %v545, %v539
    %v550 = vmul.f32 %v545, %v538
    %v551 = vmul.f32 %v545, %v537
    %v552 = vmul.f32 %v545, %v536
    %v553 = vmul.f32 %v545, %v535
    %v554 = vmul.f32 %v545, %v542
    %v555 = vadd.f32 %v511, %v547
    %v556 = vadd.f32 %v512, %v548
    %v557 = vadd.f32 %v513, %v549
    %v558 = vadd.f32 %v514, %v550
    %v559 = vadd.f32 %v515, %v551
    %v560 = vadd.f32 %v516, %v552
    %v561 = vadd.f32 %v517, %v553
    %v562 = vadd.f32 %v518, %v554
    %563 = vrot.lane.b32.xlu0 %v462, 126
    %v564 = vpop.permute.xlu0 %563
    %565 = vrot.lane.b32.xlu0 %v466, 126
    %v566 = vpop.permute.xlu0 %565
    %567 = vrot.lane.b32.xlu0 %v470, 126
    %v568 = vpop.permute.xlu0 %567
    %569 = vrot.lane.b32.xlu0 %v474, 126
    %v570 = vpop.permute.xlu0 %569
    %571 = vrot.lane.b32.xlu0 %v478, 126
    %v572 = vpop.permute.xlu0 %571
    %573 = vrot.lane.b32.xlu0 %v482, 126
    %v574 = vpop.permute.xlu0 %573
    %575 = vrot.lane.b32.xlu0 %v486, 126
    %v576 = vpop.permute.xlu0 %575
    %577 = vrot.lane.b32.xlu0 %v490, 126
    %v578 = vpop.permute.xlu0 %577
    %v579 = vsel %vm155, %v576, %v578
    %v580 = vsel %vm155, %v574, %v576
    %v581 = vsel %vm155, %v572, %v574
    %v582 = vsel %vm155, %v570, %v572
    %v583 = vsel %vm155, %v568, %v570
    %v584 = vsel %vm155, %v566, %v568
    %v585 = vsel %vm155, %v564, %v566
    %v586 = vsel %vm155, %v578, %v564
    %587 = vset.pattern.permute.xlu0 11
    %588 = vperm.xlu0 %587, %v70
    %v589 = vpop.permute.xlu0 %588
    %v591 = vmul.f32 %v589, %v585
    %v592 = vmul.f32 %v589, %v584
    %v593 = vmul.f32 %v589, %v583
    %v594 = vmul.f32 %v589, %v582
    %v595 = vmul.f32 %v589, %v581
    %v596 = vmul.f32 %v589, %v580
    %v597 = vmul.f32 %v589, %v579
    %v598 = vmul.f32 %v589, %v586
    %v599 = vadd.f32 %v555, %v591
    %v600 = vadd.f32 %v556, %v592
    %v601 = vadd.f32 %v557, %v593
    %v602 = vadd.f32 %v558, %v594
    %v603 = vadd.f32 %v559, %v595
    %v604 = vadd.f32 %v560, %v596
    %v605 = vadd.f32 %v561, %v597
    %v606 = vadd.f32 %v562, %v598
    %607 = vrot.lane.b32.xlu0 %v462, 96
    %v608 = vpop.permute.xlu0 %607
    %609 = vrot.lane.b32.xlu0 %v466, 96
    %v610 = vpop.permute.xlu0 %609
    %611 = vrot.lane.b32.xlu0 %v470, 96
    %v612 = vpop.permute.xlu0 %611
    %613 = vrot.lane.b32.xlu0 %v474, 96
    %v614 = vpop.permute.xlu0 %613
    %615 = vrot.lane.b32.xlu0 %v478, 96
    %v616 = vpop.permute.xlu0 %615
    %617 = vrot.lane.b32.xlu0 %v482, 96
    %v618 = vpop.permute.xlu0 %617
    %619 = vrot.lane.b32.xlu0 %v486, 96
    %v620 = vpop.permute.xlu0 %619
    %621 = vrot.lane.b32.xlu0 %v490, 96
    %v622 = vpop.permute.xlu0 %621
    %v623 = vsel %vm200, %v620, %v622
    %v624 = vsel %vm200, %v618, %v620
    %v625 = vsel %vm200, %v616, %v618
    %v626 = vsel %vm200, %v614, %v616
    %v627 = vsel %vm200, %v612, %v614
    %v628 = vsel %vm200, %v610, %v612
    %v629 = vsel %vm200, %v608, %v610
    %v630 = vsel %vm200, %v622, %v608
    %631 = vset.pattern.permute.xlu0 12
    %632 = vperm.xlu0 %631, %v70
    %v633 = vpop.permute.xlu0 %632
    %v635 = vmul.f32 %v633, %v629
    %v636 = vmul.f32 %v633, %v628
    %v637 = vmul.f32 %v633, %v627
    %v638 = vmul.f32 %v633, %v626
    %v639 = vmul.f32 %v633, %v625
    %v640 = vmul.f32 %v633, %v624
    %v641 = vmul.f32 %v633, %v623
    %v642 = vmul.f32 %v633, %v630
    %v643 = vadd.f32 %v599, %v635
    %v644 = vadd.f32 %v600, %v636
    %v645 = vadd.f32 %v601, %v637
    %v646 = vadd.f32 %v602, %v638
    %v647 = vadd.f32 %v603, %v639
    %v648 = vadd.f32 %v604, %v640
    %v649 = vadd.f32 %v605, %v641
    %v650 = vadd.f32 %v606, %v642
    %651 = vrot.lane.b32.xlu0 %v462, 95
    %v652 = vpop.permute.xlu0 %651
    %653 = vrot.lane.b32.xlu0 %v466, 95
    %v654 = vpop.permute.xlu0 %653
    %655 = vrot.lane.b32.xlu0 %v470, 95
    %v656 = vpop.permute.xlu0 %655
    %657 = vrot.lane.b32.xlu0 %v474, 95
    %v658 = vpop.permute.xlu0 %657
    %659 = vrot.lane.b32.xlu0 %v478, 95
    %v660 = vpop.permute.xlu0 %659
    %661 = vrot.lane.b32.xlu0 %v482, 95
    %v662 = vpop.permute.xlu0 %661
    %663 = vrot.lane.b32.xlu0 %v486, 95
    %v664 = vpop.permute.xlu0 %663
    %665 = vrot.lane.b32.xlu0 %v490, 95
    %v666 = vpop.permute.xlu0 %665
    %v667 = vsel %vm245, %v664, %v666
    %v668 = vsel %vm245, %v662, %v664
    %v669 = vsel %vm245, %v660, %v662
    %v670 = vsel %vm245, %v658, %v660
    %v671 = vsel %vm245, %v656, %v658
    %v672 = vsel %vm245, %v654, %v656
    %v673 = vsel %vm245, %v652, %v654
    %v674 = vsel %vm245, %v666, %v652
    %675 = vset.pattern.permute.xlu0 13
    %676 = vperm.xlu0 %675, %v70
    %v677 = vpop.permute.xlu0 %676
    %v679 = vmul.f32 %v677, %v673
    %v680 = vmul.f32 %v677, %v672
    %v681 = vmul.f32 %v677, %v671
    %v682 = vmul.f32 %v677, %v670
    %v683 = vmul.f32 %v677, %v669
    %v684 = vmul.f32 %v677, %v668
    %v685 = vmul.f32 %v677, %v667
    %v686 = vmul.f32 %v677, %v674
    %v687 = vadd.f32 %v643, %v679
    %v688 = vadd.f32 %v644, %v680
    %v689 = vadd.f32 %v645, %v681
    %v690 = vadd.f32 %v646, %v682
    %v691 = vadd.f32 %v647, %v683
    %v692 = vadd.f32 %v648, %v684
    %v693 = vadd.f32 %v649, %v685
    %v694 = vadd.f32 %v650, %v686
    %695 = vrot.lane.b32.xlu0 %v462, 94
    %v696 = vpop.permute.xlu0 %695
    %697 = vrot.lane.b32.xlu0 %v466, 94
    %v698 = vpop.permute.xlu0 %697
    %699 = vrot.lane.b32.xlu0 %v470, 94
    %v700 = vpop.permute.xlu0 %699
    %701 = vrot.lane.b32.xlu0 %v474, 94
    %v702 = vpop.permute.xlu0 %701
    %703 = vrot.lane.b32.xlu0 %v478, 94
    %v704 = vpop.permute.xlu0 %703
    %705 = vrot.lane.b32.xlu0 %v482, 94
    %v706 = vpop.permute.xlu0 %705
    %707 = vrot.lane.b32.xlu0 %v486, 94
    %v708 = vpop.permute.xlu0 %707
    %709 = vrot.lane.b32.xlu0 %v490, 94
    %v710 = vpop.permute.xlu0 %709
    %v711 = vsel %vm290, %v708, %v710
    %v712 = vsel %vm290, %v706, %v708
    %v713 = vsel %vm290, %v704, %v706
    %v714 = vsel %vm290, %v702, %v704
    %v715 = vsel %vm290, %v700, %v702
    %v716 = vsel %vm290, %v698, %v700
    %v717 = vsel %vm290, %v696, %v698
    %v718 = vsel %vm290, %v710, %v696
    %719 = vset.pattern.permute.xlu0 14
    %720 = vperm.xlu0 %719, %v70
    %v721 = vpop.permute.xlu0 %720
    %v723 = vmul.f32 %v721, %v717
    %v724 = vmul.f32 %v721, %v716
    %v725 = vmul.f32 %v721, %v715
    %v726 = vmul.f32 %v721, %v714
    %v727 = vmul.f32 %v721, %v713
    %v728 = vmul.f32 %v721, %v712
    %v729 = vmul.f32 %v721, %v711
    %v730 = vmul.f32 %v721, %v718
    %v731 = vadd.f32 %v687, %v723
    %v732 = vadd.f32 %v688, %v724
    %v733 = vadd.f32 %v689, %v725
    %v734 = vadd.f32 %v690, %v726
    %v735 = vadd.f32 %v691, %v727
    %v736 = vadd.f32 %v692, %v728
    %v737 = vadd.f32 %v693, %v729
    %v738 = vadd.f32 %v694, %v730
    %739 = vrot.lane.b32.xlu0 %v462, 64
    %v740 = vpop.permute.xlu0 %739
    %741 = vrot.lane.b32.xlu0 %v466, 64
    %v742 = vpop.permute.xlu0 %741
    %743 = vrot.lane.b32.xlu0 %v470, 64
    %v744 = vpop.permute.xlu0 %743
    %745 = vrot.lane.b32.xlu0 %v474, 64
    %v746 = vpop.permute.xlu0 %745
    %747 = vrot.lane.b32.xlu0 %v478, 64
    %v748 = vpop.permute.xlu0 %747
    %749 = vrot.lane.b32.xlu0 %v482, 64
    %v750 = vpop.permute.xlu0 %749
    %751 = vrot.lane.b32.xlu0 %v486, 64
    %v752 = vpop.permute.xlu0 %751
    %753 = vrot.lane.b32.xlu0 %v490, 64
    %v754 = vpop.permute.xlu0 %753
    %v755 = vsel %vm335, %v752, %v754
    %v756 = vsel %vm335, %v750, %v752
    %v757 = vsel %vm335, %v748, %v750
    %v758 = vsel %vm335, %v746, %v748
    %v759 = vsel %vm335, %v744, %v746
    %v760 = vsel %vm335, %v742, %v744
    %v761 = vsel %vm335, %v740, %v742
    %v762 = vsel %vm335, %v754, %v740
    %763 = vset.pattern.permute.xlu0 15
    %764 = vperm.xlu0 %763, %v70
    %v765 = vpop.permute.xlu0 %764
    %v767 = vmul.f32 %v765, %v761
    %v768 = vmul.f32 %v765, %v760
    %v769 = vmul.f32 %v765, %v759
    %v770 = vmul.f32 %v765, %v758
    %v771 = vmul.f32 %v765, %v757
    %v772 = vmul.f32 %v765, %v756
    %v773 = vmul.f32 %v765, %v755
    %v774 = vmul.f32 %v765, %v762
    %v775 = vadd.f32 %v731, %v767
    %v776 = vadd.f32 %v732, %v768
    %v777 = vadd.f32 %v733, %v769
    %v778 = vadd.f32 %v734, %v770
    %v779 = vadd.f32 %v735, %v771
    %v780 = vadd.f32 %v736, %v772
    %v781 = vadd.f32 %v737, %v773
    %v782 = vadd.f32 %v738, %v774
    %783 = vrot.lane.b32.xlu0 %v462, 63
    %v784 = vpop.permute.xlu0 %783
    %785 = vrot.lane.b32.xlu0 %v466, 63
    %v786 = vpop.permute.xlu0 %785
    %787 = vrot.lane.b32.xlu0 %v470, 63
    %v788 = vpop.permute.xlu0 %787
    %789 = vrot.lane.b32.xlu0 %v474, 63
    %v790 = vpop.permute.xlu0 %789
    %791 = vrot.lane.b32.xlu0 %v478, 63
    %v792 = vpop.permute.xlu0 %791
    %793 = vrot.lane.b32.xlu0 %v482, 63
    %v794 = vpop.permute.xlu0 %793
    %795 = vrot.lane.b32.xlu0 %v486, 63
    %v796 = vpop.permute.xlu0 %795
    %797 = vrot.lane.b32.xlu0 %v490, 63
    %v798 = vpop.permute.xlu0 %797
    %v799 = vsel %vm380, %v796, %v798
    %v800 = vsel %vm380, %v794, %v796
    %v801 = vsel %vm380, %v792, %v794
    %v802 = vsel %vm380, %v790, %v792
    %v803 = vsel %vm380, %v788, %v790
    %v804 = vsel %vm380, %v786, %v788
    %v805 = vsel %vm380, %v784, %v786
    %v806 = vsel %vm380, %v798, %v784
    %807 = vset.pattern.permute.xlu0 16
    %808 = vperm.xlu0 %807, %v70
    %v809 = vpop.permute.xlu0 %808
    %v811 = vmul.f32 %v809, %v805
    %v812 = vmul.f32 %v809, %v804
    %v813 = vmul.f32 %v809, %v803
    %v814 = vmul.f32 %v809, %v802
    %v815 = vmul.f32 %v809, %v801
    %v816 = vmul.f32 %v809, %v800
    %v817 = vmul.f32 %v809, %v799
    %v818 = vmul.f32 %v809, %v806
    %v819 = vadd.f32 %v775, %v811
    %v820 = vadd.f32 %v776, %v812
    %v821 = vadd.f32 %v777, %v813
    %v822 = vadd.f32 %v778, %v814
    %v823 = vadd.f32 %v779, %v815
    %v824 = vadd.f32 %v780, %v816
    %v825 = vadd.f32 %v781, %v817
    %v826 = vadd.f32 %v782, %v818
    %827 = vrot.lane.b32.xlu0 %v462, 62
    %v828 = vpop.permute.xlu0 %827
    %829 = vrot.lane.b32.xlu0 %v466, 62
    %v830 = vpop.permute.xlu0 %829
    %831 = vrot.lane.b32.xlu0 %v470, 62
    %v832 = vpop.permute.xlu0 %831
    %833 = vrot.lane.b32.xlu0 %v474, 62
    %v834 = vpop.permute.xlu0 %833
    %835 = vrot.lane.b32.xlu0 %v478, 62
    %v836 = vpop.permute.xlu0 %835
    %837 = vrot.lane.b32.xlu0 %v482, 62
    %v838 = vpop.permute.xlu0 %837
    %839 = vrot.lane.b32.xlu0 %v486, 62
    %v840 = vpop.permute.xlu0 %839
    %841 = vrot.lane.b32.xlu0 %v490, 62
    %v842 = vpop.permute.xlu0 %841
    %v843 = vsel %vm425, %v840, %v842
    %v844 = vsel %vm425, %v838, %v840
    %v845 = vsel %vm425, %v836, %v838
    %v846 = vsel %vm425, %v834, %v836
    %v847 = vsel %vm425, %v832, %v834
    %v848 = vsel %vm425, %v830, %v832
    %v849 = vsel %vm425, %v828, %v830
    %v850 = vsel %vm425, %v842, %v828
    %851 = vset.pattern.permute.xlu0 17
    %852 = vperm.xlu0 %851, %v70
    %v853 = vpop.permute.xlu0 %852
    %v855 = vmul.f32 %v853, %v849
    %v856 = vmul.f32 %v853, %v848
    %v857 = vmul.f32 %v853, %v847
    %v858 = vmul.f32 %v853, %v846
    %v859 = vmul.f32 %v853, %v845
    %v860 = vmul.f32 %v853, %v844
    %v861 = vmul.f32 %v853, %v843
    %v862 = vmul.f32 %v853, %v850
    %v863 = vadd.f32 %v819, %v855
    %v864 = vadd.f32 %v820, %v856
    %v865 = vadd.f32 %v821, %v857
    %v866 = vadd.f32 %v822, %v858
    %v867 = vadd.f32 %v823, %v859
    %v868 = vadd.f32 %v824, %v860
    %v869 = vadd.f32 %v825, %v861
    %v870 = vadd.f32 %v826, %v862
    %s871 = scalar_lea.vmem [#allocation2], 2
    %v872 = vld [vmem:[%s871] ss:$8 sm:$0xf]
    %v873 = vld [vmem:[%s871] ss:$8 sm:$0xf0]
    %v874 = vor.u32 %v872, %v873
    %v876 = vlaneseq
    %v877 = vshrl.u32 %v876, 7
    %v878 = vsub.s32 0, %v877
    %v879 = vrot.slane %v874, %v878
    %v880 = vlaneseq
    %v881 = vshrl.u32 %v880, 7
    %v882 = vsub.s32 1, %v881
    %v883 = vrot.slane %v874, %v882
    %v884 = vlaneseq
    %v885 = vshrl.u32 %v884, 7
    %v886 = vsub.s32 2, %v885
    %v887 = vrot.slane %v874, %v886
    %v888 = vlaneseq
    %v889 = vshrl.u32 %v888, 7
    %v890 = vsub.s32 3, %v889
    %v891 = vrot.slane %v874, %v890
    %v892 = vlaneseq
    %v893 = vshrl.u32 %v892, 7
    %v894 = vsub.s32 4, %v893
    %v895 = vrot.slane %v874, %v894
    %v896 = vlaneseq
    %v897 = vshrl.u32 %v896, 7
    %v898 = vsub.s32 5, %v897
    %v899 = vrot.slane %v874, %v898
    %v900 = vlaneseq
    %v901 = vshrl.u32 %v900, 7
    %v902 = vsub.s32 6, %v901
    %v903 = vrot.slane %v874, %v902
    %v904 = vlaneseq
    %v905 = vshrl.u32 %v904, 7
    %v906 = vsub.s32 7, %v905
    %v907 = vrot.slane %v874, %v906
    %916 = vset.pattern.permute.xlu0 18
    %917 = vperm.xlu0 %916, %v70
    %v918 = vpop.permute.xlu0 %917
    %v920 = vmul.f32 %v918, %v879
    %v921 = vmul.f32 %v918, %v883
    %v922 = vmul.f32 %v918, %v887
    %v923 = vmul.f32 %v918, %v891
    %v924 = vmul.f32 %v918, %v895
    %v925 = vmul.f32 %v918, %v899
    %v926 = vmul.f32 %v918, %v903
    %v927 = vmul.f32 %v918, %v907
    %v928 = vadd.f32 %v863, %v920
    %v929 = vadd.f32 %v864, %v921
    %v930 = vadd.f32 %v865, %v922
    %v931 = vadd.f32 %v866, %v923
    %v932 = vadd.f32 %v867, %v924
    %v933 = vadd.f32 %v868, %v925
    %v934 = vadd.f32 %v869, %v926
    %v935 = vadd.f32 %v870, %v927
    %936 = vrot.lane.b32.xlu0 %v879, 127
    %v937 = vpop.permute.xlu0 %936
    %938 = vrot.lane.b32.xlu0 %v883, 127
    %v939 = vpop.permute.xlu0 %938
    %940 = vrot.lane.b32.xlu0 %v887, 127
    %v941 = vpop.permute.xlu0 %940
    %942 = vrot.lane.b32.xlu0 %v891, 127
    %v943 = vpop.permute.xlu0 %942
    %944 = vrot.lane.b32.xlu0 %v895, 127
    %v945 = vpop.permute.xlu0 %944
    %946 = vrot.lane.b32.xlu0 %v899, 127
    %v947 = vpop.permute.xlu0 %946
    %948 = vrot.lane.b32.xlu0 %v903, 127
    %v949 = vpop.permute.xlu0 %948
    %950 = vrot.lane.b32.xlu0 %v907, 127
    %v951 = vpop.permute.xlu0 %950
    %v952 = vsel %vm110, %v949, %v951
    %v953 = vsel %vm110, %v947, %v949
    %v954 = vsel %vm110, %v945, %v947
    %v955 = vsel %vm110, %v943, %v945
    %v956 = vsel %vm110, %v941, %v943
    %v957 = vsel %vm110, %v939, %v941
    %v958 = vsel %vm110, %v937, %v939
    %v959 = vsel %vm110, %v951, %v937
    %960 = vset.pattern.permute.xlu0 19
    %961 = vperm.xlu0 %960, %v70
    %v962 = vpop.permute.xlu0 %961
    %v964 = vmul.f32 %v962, %v958
    %v965 = vmul.f32 %v962, %v957
    %v966 = vmul.f32 %v962, %v956
    %v967 = vmul.f32 %v962, %v955
    %v968 = vmul.f32 %v962, %v954
    %v969 = vmul.f32 %v962, %v953
    %v970 = vmul.f32 %v962, %v952
    %v971 = vmul.f32 %v962, %v959
    %v972 = vadd.f32 %v928, %v964
    %v973 = vadd.f32 %v929, %v965
    %v974 = vadd.f32 %v930, %v966
    %v975 = vadd.f32 %v931, %v967
    %v976 = vadd.f32 %v932, %v968
    %v977 = vadd.f32 %v933, %v969
    %v978 = vadd.f32 %v934, %v970
    %v979 = vadd.f32 %v935, %v971
    %980 = vrot.lane.b32.xlu0 %v879, 126
    %v981 = vpop.permute.xlu0 %980
    %982 = vrot.lane.b32.xlu0 %v883, 126
    %v983 = vpop.permute.xlu0 %982
    %984 = vrot.lane.b32.xlu0 %v887, 126
    %v985 = vpop.permute.xlu0 %984
    %986 = vrot.lane.b32.xlu0 %v891, 126
    %v987 = vpop.permute.xlu0 %986
    %988 = vrot.lane.b32.xlu0 %v895, 126
    %v989 = vpop.permute.xlu0 %988
    %990 = vrot.lane.b32.xlu0 %v899, 126
    %v991 = vpop.permute.xlu0 %990
    %992 = vrot.lane.b32.xlu0 %v903, 126
    %v993 = vpop.permute.xlu0 %992
    %994 = vrot.lane.b32.xlu0 %v907, 126
    %v995 = vpop.permute.xlu0 %994
    %v996 = vsel %vm155, %v993, %v995
    %v997 = vsel %vm155, %v991, %v993
    %v998 = vsel %vm155, %v989, %v991
    %v999 = vsel %vm155, %v987, %v989
    %v1000 = vsel %vm155, %v985, %v987
    %v1001 = vsel %vm155, %v983, %v985
    %v1002 = vsel %vm155, %v981, %v983
    %v1003 = vsel %vm155, %v995, %v981
    %1004 = vset.pattern.permute.xlu0 20
    %1005 = vperm.xlu0 %1004, %v70
    %v1006 = vpop.permute.xlu0 %1005
    %v1008 = vmul.f32 %v1006, %v1002
    %v1009 = vmul.f32 %v1006, %v1001
    %v1010 = vmul.f32 %v1006, %v1000
    %v1011 = vmul.f32 %v1006, %v999
    %v1012 = vmul.f32 %v1006, %v998
    %v1013 = vmul.f32 %v1006, %v997
    %v1014 = vmul.f32 %v1006, %v996
    %v1015 = vmul.f32 %v1006, %v1003
    %v1016 = vadd.f32 %v972, %v1008
    %v1017 = vadd.f32 %v973, %v1009
    %v1018 = vadd.f32 %v974, %v1010
    %v1019 = vadd.f32 %v975, %v1011
    %v1020 = vadd.f32 %v976, %v1012
    %v1021 = vadd.f32 %v977, %v1013
    %v1022 = vadd.f32 %v978, %v1014
    %v1023 = vadd.f32 %v979, %v1015
    %1024 = vrot.lane.b32.xlu0 %v879, 96
    %v1025 = vpop.permute.xlu0 %1024
    %1026 = vrot.lane.b32.xlu0 %v883, 96
    %v1027 = vpop.permute.xlu0 %1026
    %1028 = vrot.lane.b32.xlu0 %v887, 96
    %v1029 = vpop.permute.xlu0 %1028
    %1030 = vrot.lane.b32.xlu0 %v891, 96
    %v1031 = vpop.permute.xlu0 %1030
    %1032 = vrot.lane.b32.xlu0 %v895, 96
    %v1033 = vpop.permute.xlu0 %1032
    %1034 = vrot.lane.b32.xlu0 %v899, 96
    %v1035 = vpop.permute.xlu0 %1034
    %1036 = vrot.lane.b32.xlu0 %v903, 96
    %v1037 = vpop.permute.xlu0 %1036
    %1038 = vrot.lane.b32.xlu0 %v907, 96
    %v1039 = vpop.permute.xlu0 %1038
    %v1040 = vsel %vm200, %v1037, %v1039
    %v1041 = vsel %vm200, %v1035, %v1037
    %v1042 = vsel %vm200, %v1033, %v1035
    %v1043 = vsel %vm200, %v1031, %v1033
    %v1044 = vsel %vm200, %v1029, %v1031
    %v1045 = vsel %vm200, %v1027, %v1029
    %v1046 = vsel %vm200, %v1025, %v1027
    %v1047 = vsel %vm200, %v1039, %v1025
    %1048 = vset.pattern.permute.xlu0 21
    %1049 = vperm.xlu0 %1048, %v70
    %v1050 = vpop.permute.xlu0 %1049
    %v1052 = vmul.f32 %v1050, %v1046
    %v1053 = vmul.f32 %v1050, %v1045
    %v1054 = vmul.f32 %v1050, %v1044
    %v1055 = vmul.f32 %v1050, %v1043
    %v1056 = vmul.f32 %v1050, %v1042
    %v1057 = vmul.f32 %v1050, %v1041
    %v1058 = vmul.f32 %v1050, %v1040
    %v1059 = vmul.f32 %v1050, %v1047
    %v1060 = vadd.f32 %v1016, %v1052
    %v1061 = vadd.f32 %v1017, %v1053
    %v1062 = vadd.f32 %v1018, %v1054
    %v1063 = vadd.f32 %v1019, %v1055
    %v1064 = vadd.f32 %v1020, %v1056
    %v1065 = vadd.f32 %v1021, %v1057
    %v1066 = vadd.f32 %v1022, %v1058
    %v1067 = vadd.f32 %v1023, %v1059
    %1068 = vrot.lane.b32.xlu0 %v879, 95
    %v1069 = vpop.permute.xlu0 %1068
    %1070 = vrot.lane.b32.xlu0 %v883, 95
    %v1071 = vpop.permute.xlu0 %1070
    %1072 = vrot.lane.b32.xlu0 %v887, 95
    %v1073 = vpop.permute.xlu0 %1072
    %1074 = vrot.lane.b32.xlu0 %v891, 95
    %v1075 = vpop.permute.xlu0 %1074
    %1076 = vrot.lane.b32.xlu0 %v895, 95
    %v1077 = vpop.permute.xlu0 %1076
    %1078 = vrot.lane.b32.xlu0 %v899, 95
    %v1079 = vpop.permute.xlu0 %1078
    %1080 = vrot.lane.b32.xlu0 %v903, 95
    %v1081 = vpop.permute.xlu0 %1080
    %1082 = vrot.lane.b32.xlu0 %v907, 95
    %v1083 = vpop.permute.xlu0 %1082
    %v1084 = vsel %vm245, %v1081, %v1083
    %v1085 = vsel %vm245, %v1079, %v1081
    %v1086 = vsel %vm245, %v1077, %v1079
    %v1087 = vsel %vm245, %v1075, %v1077
    %v1088 = vsel %vm245, %v1073, %v1075
    %v1089 = vsel %vm245, %v1071, %v1073
    %v1090 = vsel %vm245, %v1069, %v1071
    %v1091 = vsel %vm245, %v1083, %v1069
    %1092 = vset.pattern.permute.xlu0 22
    %1093 = vperm.xlu0 %1092, %v70
    %v1094 = vpop.permute.xlu0 %1093
    %v1096 = vmul.f32 %v1094, %v1090
    %v1097 = vmul.f32 %v1094, %v1089
    %v1098 = vmul.f32 %v1094, %v1088
    %v1099 = vmul.f32 %v1094, %v1087
    %v1100 = vmul.f32 %v1094, %v1086
    %v1101 = vmul.f32 %v1094, %v1085
    %v1102 = vmul.f32 %v1094, %v1084
    %v1103 = vmul.f32 %v1094, %v1091
    %v1104 = vadd.f32 %v1060, %v1096
    %v1105 = vadd.f32 %v1061, %v1097
    %v1106 = vadd.f32 %v1062, %v1098
    %v1107 = vadd.f32 %v1063, %v1099
    %v1108 = vadd.f32 %v1064, %v1100
    %v1109 = vadd.f32 %v1065, %v1101
    %v1110 = vadd.f32 %v1066, %v1102
    %v1111 = vadd.f32 %v1067, %v1103
    %1112 = vrot.lane.b32.xlu0 %v879, 94
    %v1113 = vpop.permute.xlu0 %1112
    %1114 = vrot.lane.b32.xlu0 %v883, 94
    %v1115 = vpop.permute.xlu0 %1114
    %1116 = vrot.lane.b32.xlu0 %v887, 94
    %v1117 = vpop.permute.xlu0 %1116
    %1118 = vrot.lane.b32.xlu0 %v891, 94
    %v1119 = vpop.permute.xlu0 %1118
    %1120 = vrot.lane.b32.xlu0 %v895, 94
    %v1121 = vpop.permute.xlu0 %1120
    %1122 = vrot.lane.b32.xlu0 %v899, 94
    %v1123 = vpop.permute.xlu0 %1122
    %1124 = vrot.lane.b32.xlu0 %v903, 94
    %v1125 = vpop.permute.xlu0 %1124
    %1126 = vrot.lane.b32.xlu0 %v907, 94
    %v1127 = vpop.permute.xlu0 %1126
    %v1128 = vsel %vm290, %v1125, %v1127
    %v1129 = vsel %vm290, %v1123, %v1125
    %v1130 = vsel %vm290, %v1121, %v1123
    %v1131 = vsel %vm290, %v1119, %v1121
    %v1132 = vsel %vm290, %v1117, %v1119
    %v1133 = vsel %vm290, %v1115, %v1117
    %v1134 = vsel %vm290, %v1113, %v1115
    %v1135 = vsel %vm290, %v1127, %v1113
    %1136 = vset.pattern.permute.xlu0 23
    %1137 = vperm.xlu0 %1136, %v70
    %v1138 = vpop.permute.xlu0 %1137
    %v1140 = vmul.f32 %v1138, %v1134
    %v1141 = vmul.f32 %v1138, %v1133
    %v1142 = vmul.f32 %v1138, %v1132
    %v1143 = vmul.f32 %v1138, %v1131
    %v1144 = vmul.f32 %v1138, %v1130
    %v1145 = vmul.f32 %v1138, %v1129
    %v1146 = vmul.f32 %v1138, %v1128
    %v1147 = vmul.f32 %v1138, %v1135
    %v1148 = vadd.f32 %v1104, %v1140
    %v1149 = vadd.f32 %v1105, %v1141
    %v1150 = vadd.f32 %v1106, %v1142
    %v1151 = vadd.f32 %v1107, %v1143
    %v1152 = vadd.f32 %v1108, %v1144
    %v1153 = vadd.f32 %v1109, %v1145
    %v1154 = vadd.f32 %v1110, %v1146
    %v1155 = vadd.f32 %v1111, %v1147
    %1156 = vrot.lane.b32.xlu0 %v879, 64
    %v1157 = vpop.permute.xlu0 %1156
    %1158 = vrot.lane.b32.xlu0 %v883, 64
    %v1159 = vpop.permute.xlu0 %1158
    %1160 = vrot.lane.b32.xlu0 %v887, 64
    %v1161 = vpop.permute.xlu0 %1160
    %1162 = vrot.lane.b32.xlu0 %v891, 64
    %v1163 = vpop.permute.xlu0 %1162
    %1164 = vrot.lane.b32.xlu0 %v895, 64
    %v1165 = vpop.permute.xlu0 %1164
    %1166 = vrot.lane.b32.xlu0 %v899, 64
    %v1167 = vpop.permute.xlu0 %1166
    %1168 = vrot.lane.b32.xlu0 %v903, 64
    %v1169 = vpop.permute.xlu0 %1168
    %1170 = vrot.lane.b32.xlu0 %v907, 64
    %v1171 = vpop.permute.xlu0 %1170
    %v1172 = vsel %vm335, %v1169, %v1171
    %v1173 = vsel %vm335, %v1167, %v1169
    %v1174 = vsel %vm335, %v1165, %v1167
    %v1175 = vsel %vm335, %v1163, %v1165
    %v1176 = vsel %vm335, %v1161, %v1163
    %v1177 = vsel %vm335, %v1159, %v1161
    %v1178 = vsel %vm335, %v1157, %v1159
    %v1179 = vsel %vm335, %v1171, %v1157
    %1180 = vset.pattern.permute.xlu0 24
    %1181 = vperm.xlu0 %1180, %v70
    %v1182 = vpop.permute.xlu0 %1181
    %v1184 = vmul.f32 %v1182, %v1178
    %v1185 = vmul.f32 %v1182, %v1177
    %v1186 = vmul.f32 %v1182, %v1176
    %v1187 = vmul.f32 %v1182, %v1175
    %v1188 = vmul.f32 %v1182, %v1174
    %v1189 = vmul.f32 %v1182, %v1173
    %v1190 = vmul.f32 %v1182, %v1172
    %v1191 = vmul.f32 %v1182, %v1179
    %v1192 = vadd.f32 %v1148, %v1184
    %v1193 = vadd.f32 %v1149, %v1185
    %v1194 = vadd.f32 %v1150, %v1186
    %v1195 = vadd.f32 %v1151, %v1187
    %v1196 = vadd.f32 %v1152, %v1188
    %v1197 = vadd.f32 %v1153, %v1189
    %v1198 = vadd.f32 %v1154, %v1190
    %v1199 = vadd.f32 %v1155, %v1191
    %1200 = vrot.lane.b32.xlu0 %v879, 63
    %v1201 = vpop.permute.xlu0 %1200
    %1202 = vrot.lane.b32.xlu0 %v883, 63
    %v1203 = vpop.permute.xlu0 %1202
    %1204 = vrot.lane.b32.xlu0 %v887, 63
    %v1205 = vpop.permute.xlu0 %1204
    %1206 = vrot.lane.b32.xlu0 %v891, 63
    %v1207 = vpop.permute.xlu0 %1206
    %1208 = vrot.lane.b32.xlu0 %v895, 63
    %v1209 = vpop.permute.xlu0 %1208
    %1210 = vrot.lane.b32.xlu0 %v899, 63
    %v1211 = vpop.permute.xlu0 %1210
    %1212 = vrot.lane.b32.xlu0 %v903, 63
    %v1213 = vpop.permute.xlu0 %1212
    %1214 = vrot.lane.b32.xlu0 %v907, 63
    %v1215 = vpop.permute.xlu0 %1214
    %v1216 = vsel %vm380, %v1213, %v1215
    %v1217 = vsel %vm380, %v1211, %v1213
    %v1218 = vsel %vm380, %v1209, %v1211
    %v1219 = vsel %vm380, %v1207, %v1209
    %v1220 = vsel %vm380, %v1205, %v1207
    %v1221 = vsel %vm380, %v1203, %v1205
    %v1222 = vsel %vm380, %v1201, %v1203
    %v1223 = vsel %vm380, %v1215, %v1201
    %1224 = vset.pattern.permute.xlu0 25
    %1225 = vperm.xlu0 %1224, %v70
    %v1226 = vpop.permute.xlu0 %1225
    %v1228 = vmul.f32 %v1226, %v1222
    %v1229 = vmul.f32 %v1226, %v1221
    %v1230 = vmul.f32 %v1226, %v1220
    %v1231 = vmul.f32 %v1226, %v1219
    %v1232 = vmul.f32 %v1226, %v1218
    %v1233 = vmul.f32 %v1226, %v1217
    %v1234 = vmul.f32 %v1226, %v1216
    %v1235 = vmul.f32 %v1226, %v1223
    %v1236 = vadd.f32 %v1192, %v1228
    %v1237 = vadd.f32 %v1193, %v1229
    %v1238 = vadd.f32 %v1194, %v1230
    %v1239 = vadd.f32 %v1195, %v1231
    %v1240 = vadd.f32 %v1196, %v1232
    %v1241 = vadd.f32 %v1197, %v1233
    %v1242 = vadd.f32 %v1198, %v1234
    %v1243 = vadd.f32 %v1199, %v1235
    %1244 = vrot.lane.b32.xlu0 %v879, 62
    %v1245 = vpop.permute.xlu0 %1244
    %1246 = vrot.lane.b32.xlu0 %v883, 62
    %v1247 = vpop.permute.xlu0 %1246
    %1248 = vrot.lane.b32.xlu0 %v887, 62
    %v1249 = vpop.permute.xlu0 %1248
    %1250 = vrot.lane.b32.xlu0 %v891, 62
    %v1251 = vpop.permute.xlu0 %1250
    %1252 = vrot.lane.b32.xlu0 %v895, 62
    %v1253 = vpop.permute.xlu0 %1252
    %1254 = vrot.lane.b32.xlu0 %v899, 62
    %v1255 = vpop.permute.xlu0 %1254
    %1256 = vrot.lane.b32.xlu0 %v903, 62
    %v1257 = vpop.permute.xlu0 %1256
    %1258 = vrot.lane.b32.xlu0 %v907, 62
    %v1259 = vpop.permute.xlu0 %1258
    %v1260 = vsel %vm425, %v1257, %v1259
    %v1261 = vsel %vm425, %v1255, %v1257
    %v1262 = vsel %vm425, %v1253, %v1255
    %v1263 = vsel %vm425, %v1251, %v1253
    %v1264 = vsel %vm425, %v1249, %v1251
    %v1265 = vsel %vm425, %v1247, %v1249
    %v1266 = vsel %vm425, %v1245, %v1247
    %v1267 = vsel %vm425, %v1259, %v1245
    %1268 = vset.pattern.permute.xlu0 26
    %1269 = vperm.xlu0 %1268, %v70
    %v1270 = vpop.permute.xlu0 %1269
    %v1272 = vmul.f32 %v1270, %v1266
    %v1273 = vmul.f32 %v1270, %v1265
    %v1274 = vmul.f32 %v1270, %v1264
    %v1275 = vmul.f32 %v1270, %v1263
    %v1276 = vmul.f32 %v1270, %v1262
    %v1277 = vmul.f32 %v1270, %v1261
    %v1278 = vmul.f32 %v1270, %v1260
    %v1279 = vmul.f32 %v1270, %v1267
    %v1280 = vadd.f32 %v1236, %v1272
    %v1281 = vadd.f32 %v1237, %v1273
    %v1282 = vadd.f32 %v1238, %v1274
    %v1283 = vadd.f32 %v1239, %v1275
    %v1284 = vadd.f32 %v1240, %v1276
    %v1285 = vadd.f32 %v1241, %v1277
    %v1286 = vadd.f32 %v1242, %v1278
    %v1287 = vadd.f32 %v1243, %v1279
    %v1288 = vld [vmem:[%s2] sm:$0x7]
    %1290 = vset.pattern.permute.xlu0 0
    %1291 = vperm.xlu0 %1290, %v1288
    %v1292 = vpop.permute.xlu0 %1291
    %v1294 = vadd.f32 %v1280, %v1292
    %v1295 = vadd.f32 %v1281, %v1292
    %v1296 = vadd.f32 %v1282, %v1292
    %v1297 = vadd.f32 %v1283, %v1292
    %v1298 = vadd.f32 %v1284, %v1292
    %v1299 = vadd.f32 %v1285, %v1292
    %v1300 = vadd.f32 %v1286, %v1292
    %v1301 = vadd.f32 %v1287, %v1292
    %v1302 = vmax.f32 %v1294, 0.0
    %v1303 = vmax.f32 %v1295, 0.0
    %v1304 = vmax.f32 %v1296, 0.0
    %v1305 = vmax.f32 %v1297, 0.0
    %v1306 = vmax.f32 %v1298, 0.0
    %v1307 = vmax.f32 %v1299, 0.0
    %v1308 = vmax.f32 %v1300, 0.0
    %v1309 = vmax.f32 %v1301, 0.0
    %v1318 = vcombine.low %v1302, %v1303
    %v1319 = vcombine.low %v1304, %v1305
    %v1320 = vcombine.low %v1306, %v1307
    %v1321 = vcombine.low %v1308, %v1309
    %1326 = vst [vmem:[%s3] sm:$0x77] %v1318
    %1327 = vst [vmem:[%s3 + $0x8] sm:$0x77] %v1319
    %1328 = vst [vmem:[%s3 + $0x10] sm:$0x77] %v1320
    %1329 = vst [vmem:[%s3 + $0x18] sm:$0x77] %v1321
    %s1330 = scalar_lea.vmem [#allocation2], 3
    %v1331 = vld [vmem:[%s1330] ss:$8 sm:$0xf]
    %v1332 = vld [vmem:[%s1330] ss:$8 sm:$0xf0]
    %v1333 = vor.u32 %v1331, %v1332
    %v1335 = vlaneseq
    %v1336 = vshrl.u32 %v1335, 7
    %v1337 = vsub.s32 0, %v1336
    %v1338 = vrot.slane %v1333, %v1337
    %v1339 = vlaneseq
    %v1340 = vshrl.u32 %v1339, 7
    %v1341 = vsub.s32 1, %v1340
    %v1342 = vrot.slane %v1333, %v1341
    %v1343 = vlaneseq
    %v1344 = vshrl.u32 %v1343, 7
    %v1345 = vsub.s32 2, %v1344
    %v1346 = vrot.slane %v1333, %v1345
    %v1347 = vlaneseq
    %v1348 = vshrl.u32 %v1347, 7
    %v1349 = vsub.s32 3, %v1348
    %v1350 = vrot.slane %v1333, %v1349
    %v1351 = vlaneseq
    %v1352 = vshrl.u32 %v1351, 7
    %v1353 = vsub.s32 4, %v1352
    %v1354 = vrot.slane %v1333, %v1353
    %v1355 = vlaneseq
    %v1356 = vshrl.u32 %v1355, 7
    %v1357 = vsub.s32 5, %v1356
    %v1358 = vrot.slane %v1333, %v1357
    %v1359 = vlaneseq
    %v1360 = vshrl.u32 %v1359, 7
    %v1361 = vsub.s32 6, %v1360
    %v1362 = vrot.slane %v1333, %v1361
    %v1363 = vlaneseq
    %v1364 = vshrl.u32 %v1363, 7
    %v1365 = vsub.s32 7, %v1364
    %v1366 = vrot.slane %v1333, %v1365
    %v1375 = vld [vmem:[%s1] sm:$0x7]
    %1377 = vset.pattern.permute.xlu0 0
    %1378 = vperm.xlu0 %1377, %v1375
    %v1379 = vpop.permute.xlu0 %1378
    %v1381 = vmul.f32 %v1379, %v1338
    %v1382 = vmul.f32 %v1379, %v1342
    %v1383 = vmul.f32 %v1379, %v1346
    %v1384 = vmul.f32 %v1379, %v1350
    %v1385 = vmul.f32 %v1379, %v1354
    %v1386 = vmul.f32 %v1379, %v1358
    %v1387 = vmul.f32 %v1379, %v1362
    %v1388 = vmul.f32 %v1379, %v1366
    %v1389 = vadd.f32 %v1381, 0.0
    %v1390 = vadd.f32 %v1382, 0.0
    %v1391 = vadd.f32 %v1383, 0.0
    %v1392 = vadd.f32 %v1384, 0.0
    %v1393 = vadd.f32 %v1385, 0.0
    %v1394 = vadd.f32 %v1386, 0.0
    %v1395 = vadd.f32 %v1387, 0.0
    %v1396 = vadd.f32 %v1388, 0.0
    %1397 = vrot.lane.b32.xlu0 %v1338, 127
    %v1398 = vpop.permute.xlu0 %1397
    %1399 = vrot.lane.b32.xlu0 %v1342, 127
    %v1400 = vpop.permute.xlu0 %1399
    %1401 = vrot.lane.b32.xlu0 %v1346, 127
    %v1402 = vpop.permute.xlu0 %1401
    %1403 = vrot.lane.b32.xlu0 %v1350, 127
    %v1404 = vpop.permute.xlu0 %1403
    %1405 = vrot.lane.b32.xlu0 %v1354, 127
    %v1406 = vpop.permute.xlu0 %1405
    %1407 = vrot.lane.b32.xlu0 %v1358, 127
    %v1408 = vpop.permute.xlu0 %1407
    %1409 = vrot.lane.b32.xlu0 %v1362, 127
    %v1410 = vpop.permute.xlu0 %1409
    %1411 = vrot.lane.b32.xlu0 %v1366, 127
    %v1412 = vpop.permute.xlu0 %1411
    %v1413 = vsel %vm110, %v1410, %v1412
    %v1414 = vsel %vm110, %v1408, %v1410
    %v1415 = vsel %vm110, %v1406, %v1408
    %v1416 = vsel %vm110, %v1404, %v1406
    %v1417 = vsel %vm110, %v1402, %v1404
    %v1418 = vsel %vm110, %v1400, %v1402
    %v1419 = vsel %vm110, %v1398, %v1400
    %v1420 = vsel %vm110, %v1412, %v1398
    %1421 = vset.pattern.permute.xlu0 1
    %1422 = vperm.xlu0 %1421, %v1375
    %v1423 = vpop.permute.xlu0 %1422
    %v1425 = vmul.f32 %v1423, %v1419
    %v1426 = vmul.f32 %v1423, %v1418
    %v1427 = vmul.f32 %v1423, %v1417
    %v1428 = vmul.f32 %v1423, %v1416
    %v1429 = vmul.f32 %v1423, %v1415
    %v1430 = vmul.f32 %v1423, %v1414
    %v1431 = vmul.f32 %v1423, %v1413
    %v1432 = vmul.f32 %v1423, %v1420
    %v1433 = vadd.f32 %v1389, %v1425
    %v1434 = vadd.f32 %v1390, %v1426
    %v1435 = vadd.f32 %v1391, %v1427
    %v1436 = vadd.f32 %v1392, %v1428
    %v1437 = vadd.f32 %v1393, %v1429
    %v1438 = vadd.f32 %v1394, %v1430
    %v1439 = vadd.f32 %v1395, %v1431
    %v1440 = vadd.f32 %v1396, %v1432
    %1441 = vrot.lane.b32.xlu0 %v1338, 126
    %v1442 = vpop.permute.xlu0 %1441
    %1443 = vrot.lane.b32.xlu0 %v1342, 126
    %v1444 = vpop.permute.xlu0 %1443
    %1445 = vrot.lane.b32.xlu0 %v1346, 126
    %v1446 = vpop.permute.xlu0 %1445
    %1447 = vrot.lane.b32.xlu0 %v1350, 126
    %v1448 = vpop.permute.xlu0 %1447
    %1449 = vrot.lane.b32.xlu0 %v1354, 126
    %v1450 = vpop.permute.xlu0 %1449
    %1451 = vrot.lane.b32.xlu0 %v1358, 126
    %v1452 = vpop.permute.xlu0 %1451
    %1453 = vrot.lane.b32.xlu0 %v1362, 126
    %v1454 = vpop.permute.xlu0 %1453
    %1455 = vrot.lane.b32.xlu0 %v1366, 126
    %v1456 = vpop.permute.xlu0 %1455
    %v1457 = vsel %vm155, %v1454, %v1456
    %v1458 = vsel %vm155, %v1452, %v1454
    %v1459 = vsel %vm155, %v1450, %v1452
    %v1460 = vsel %vm155, %v1448, %v1450
    %v1461 = vsel %vm155, %v1446, %v1448
    %v1462 = vsel %vm155, %v1444, %v1446
    %v1463 = vsel %vm155, %v1442, %v1444
    %v1464 = vsel %vm155, %v1456, %v1442
    %1465 = vset.pattern.permute.xlu0 2
    %1466 = vperm.xlu0 %1465, %v1375
    %v1467 = vpop.permute.xlu0 %1466
    %v1469 = vmul.f32 %v1467, %v1463
    %v1470 = vmul.f32 %v1467, %v1462
    %v1471 = vmul.f32 %v1467, %v1461
    %v1472 = vmul.f32 %v1467, %v1460
    %v1473 = vmul.f32 %v1467, %v1459
    %v1474 = vmul.f32 %v1467, %v1458
    %v1475 = vmul.f32 %v1467, %v1457
    %v1476 = vmul.f32 %v1467, %v1464
    %v1477 = vadd.f32 %v1433, %v1469
    %v1478 = vadd.f32 %v1434, %v1470
    %v1479 = vadd.f32 %v1435, %v1471
    %v1480 = vadd.f32 %v1436, %v1472
    %v1481 = vadd.f32 %v1437, %v1473
    %v1482 = vadd.f32 %v1438, %v1474
    %v1483 = vadd.f32 %v1439, %v1475
    %v1484 = vadd.f32 %v1440, %v1476
    %1485 = vrot.lane.b32.xlu0 %v1338, 96
    %v1486 = vpop.permute.xlu0 %1485
    %1487 = vrot.lane.b32.xlu0 %v1342, 96
    %v1488 = vpop.permute.xlu0 %1487
    %1489 = vrot.lane.b32.xlu0 %v1346, 96
    %v1490 = vpop.permute.xlu0 %1489
    %1491 = vrot.lane.b32.xlu0 %v1350, 96
    %v1492 = vpop.permute.xlu0 %1491
    %1493 = vrot.lane.b32.xlu0 %v1354, 96
    %v1494 = vpop.permute.xlu0 %1493
    %1495 = vrot.lane.b32.xlu0 %v1358, 96
    %v1496 = vpop.permute.xlu0 %1495
    %1497 = vrot.lane.b32.xlu0 %v1362, 96
    %v1498 = vpop.permute.xlu0 %1497
    %1499 = vrot.lane.b32.xlu0 %v1366, 96
    %v1500 = vpop.permute.xlu0 %1499
    %v1501 = vsel %vm200, %v1498, %v1500
    %v1502 = vsel %vm200, %v1496, %v1498
    %v1503 = vsel %vm200, %v1494, %v1496
    %v1504 = vsel %vm200, %v1492, %v1494
    %v1505 = vsel %vm200, %v1490, %v1492
    %v1506 = vsel %vm200, %v1488, %v1490
    %v1507 = vsel %vm200, %v1486, %v1488
    %v1508 = vsel %vm200, %v1500, %v1486
    %1509 = vset.pattern.permute.xlu0 3
    %1510 = vperm.xlu0 %1509, %v1375
    %v1511 = vpop.permute.xlu0 %1510
    %v1513 = vmul.f32 %v1511, %v1507
    %v1514 = vmul.f32 %v1511, %v1506
    %v1515 = vmul.f32 %v1511, %v1505
    %v1516 = vmul.f32 %v1511, %v1504
    %v1517 = vmul.f32 %v1511, %v1503
    %v1518 = vmul.f32 %v1511, %v1502
    %v1519 = vmul.f32 %v1511, %v1501
    %v1520 = vmul.f32 %v1511, %v1508
    %v1521 = vadd.f32 %v1477, %v1513
    %v1522 = vadd.f32 %v1478, %v1514
    %v1523 = vadd.f32 %v1479, %v1515
    %v1524 = vadd.f32 %v1480, %v1516
    %v1525 = vadd.f32 %v1481, %v1517
    %v1526 = vadd.f32 %v1482, %v1518
    %v1527 = vadd.f32 %v1483, %v1519
    %v1528 = vadd.f32 %v1484, %v1520
    %1529 = vrot.lane.b32.xlu0 %v1338, 95
    %v1530 = vpop.permute.xlu0 %1529
    %1531 = vrot.lane.b32.xlu0 %v1342, 95
    %v1532 = vpop.permute.xlu0 %1531
    %1533 = vrot.lane.b32.xlu0 %v1346, 95
    %v1534 = vpop.permute.xlu0 %1533
    %1535 = vrot.lane.b32.xlu0 %v1350, 95
    %v1536 = vpop.permute.xlu0 %1535
    %1537 = vrot.lane.b32.xlu0 %v1354, 95
    %v1538 = vpop.permute.xlu0 %1537
    %1539 = vrot.lane.b32.xlu0 %v1358, 95
    %v1540 = vpop.permute.xlu0 %1539
    %1541 = vrot.lane.b32.xlu0 %v1362, 95
    %v1542 = vpop.permute.xlu0 %1541
    %1543 = vrot.lane.b32.xlu0 %v1366, 95
    %v1544 = vpop.permute.xlu0 %1543
    %v1545 = vsel %vm245, %v1542, %v1544
    %v1546 = vsel %vm245, %v1540, %v1542
    %v1547 = vsel %vm245, %v1538, %v1540
    %v1548 = vsel %vm245, %v1536, %v1538
    %v1549 = vsel %vm245, %v1534, %v1536
    %v1550 = vsel %vm245, %v1532, %v1534
    %v1551 = vsel %vm245, %v1530, %v1532
    %v1552 = vsel %vm245, %v1544, %v1530
    %1553 = vset.pattern.permute.xlu0 4
    %1554 = vperm.xlu0 %1553, %v1375
    %v1555 = vpop.permute.xlu0 %1554
    %v1557 = vmul.f32 %v1555, %v1551
    %v1558 = vmul.f32 %v1555, %v1550
    %v1559 = vmul.f32 %v1555, %v1549
    %v1560 = vmul.f32 %v1555, %v1548
    %v1561 = vmul.f32 %v1555, %v1547
    %v1562 = vmul.f32 %v1555, %v1546
    %v1563 = vmul.f32 %v1555, %v1545
    %v1564 = vmul.f32 %v1555, %v1552
    %v1565 = vadd.f32 %v1521, %v1557
    %v1566 = vadd.f32 %v1522, %v1558
    %v1567 = vadd.f32 %v1523, %v1559
    %v1568 = vadd.f32 %v1524, %v1560
    %v1569 = vadd.f32 %v1525, %v1561
    %v1570 = vadd.f32 %v1526, %v1562
    %v1571 = vadd.f32 %v1527, %v1563
    %v1572 = vadd.f32 %v1528, %v1564
    %1573 = vrot.lane.b32.xlu0 %v1338, 94
    %v1574 = vpop.permute.xlu0 %1573
    %1575 = vrot.lane.b32.xlu0 %v1342, 94
    %v1576 = vpop.permute.xlu0 %1575
    %1577 = vrot.lane.b32.xlu0 %v1346, 94
    %v1578 = vpop.permute.xlu0 %1577
    %1579 = vrot.lane.b32.xlu0 %v1350, 94
    %v1580 = vpop.permute.xlu0 %1579
    %1581 = vrot.lane.b32.xlu0 %v1354, 94
    %v1582 = vpop.permute.xlu0 %1581
    %1583 = vrot.lane.b32.xlu0 %v1358, 94
    %v1584 = vpop.permute.xlu0 %1583
    %1585 = vrot.lane.b32.xlu0 %v1362, 94
    %v1586 = vpop.permute.xlu0 %1585
    %1587 = vrot.lane.b32.xlu0 %v1366, 94
    %v1588 = vpop.permute.xlu0 %1587
    %v1589 = vsel %vm290, %v1586, %v1588
    %v1590 = vsel %vm290, %v1584, %v1586
    %v1591 = vsel %vm290, %v1582, %v1584
    %v1592 = vsel %vm290, %v1580, %v1582
    %v1593 = vsel %vm290, %v1578, %v1580
    %v1594 = vsel %vm290, %v1576, %v1578
    %v1595 = vsel %vm290, %v1574, %v1576
    %v1596 = vsel %vm290, %v1588, %v1574
    %1597 = vset.pattern.permute.xlu0 5
    %1598 = vperm.xlu0 %1597, %v1375
    %v1599 = vpop.permute.xlu0 %1598
    %v1601 = vmul.f32 %v1599, %v1595
    %v1602 = vmul.f32 %v1599, %v1594
    %v1603 = vmul.f32 %v1599, %v1593
    %v1604 = vmul.f32 %v1599, %v1592
    %v1605 = vmul.f32 %v1599, %v1591
    %v1606 = vmul.f32 %v1599, %v1590
    %v1607 = vmul.f32 %v1599, %v1589
    %v1608 = vmul.f32 %v1599, %v1596
    %v1609 = vadd.f32 %v1565, %v1601
    %v1610 = vadd.f32 %v1566, %v1602
    %v1611 = vadd.f32 %v1567, %v1603
    %v1612 = vadd.f32 %v1568, %v1604
    %v1613 = vadd.f32 %v1569, %v1605
    %v1614 = vadd.f32 %v1570, %v1606
    %v1615 = vadd.f32 %v1571, %v1607
    %v1616 = vadd.f32 %v1572, %v1608
    %1617 = vrot.lane.b32.xlu0 %v1338, 64
    %v1618 = vpop.permute.xlu0 %1617
    %1619 = vrot.lane.b32.xlu0 %v1342, 64
    %v1620 = vpop.permute.xlu0 %1619
    %1621 = vrot.lane.b32.xlu0 %v1346, 64
    %v1622 = vpop.permute.xlu0 %1621
    %1623 = vrot.lane.b32.xlu0 %v1350, 64
    %v1624 = vpop.permute.xlu0 %1623
    %1625 = vrot.lane.b32.xlu0 %v1354, 64
    %v1626 = vpop.permute.xlu0 %1625
    %1627 = vrot.lane.b32.xlu0 %v1358, 64
    %v1628 = vpop.permute.xlu0 %1627
    %1629 = vrot.lane.b32.xlu0 %v1362, 64
    %v1630 = vpop.permute.xlu0 %1629
    %1631 = vrot.lane.b32.xlu0 %v1366, 64
    %v1632 = vpop.permute.xlu0 %1631
    %v1633 = vsel %vm335, %v1630, %v1632
    %v1634 = vsel %vm335, %v1628, %v1630
    %v1635 = vsel %vm335, %v1626, %v1628
    %v1636 = vsel %vm335, %v1624, %v1626
    %v1637 = vsel %vm335, %v1622, %v1624
    %v1638 = vsel %vm335, %v1620, %v1622
    %v1639 = vsel %vm335, %v1618, %v1620
    %v1640 = vsel %vm335, %v1632, %v1618
    %1641 = vset.pattern.permute.xlu0 6
    %1642 = vperm.xlu0 %1641, %v1375
    %v1643 = vpop.permute.xlu0 %1642
    %v1645 = vmul.f32 %v1643, %v1639
    %v1646 = vmul.f32 %v1643, %v1638
    %v1647 = vmul.f32 %v1643, %v1637
    %v1648 = vmul.f32 %v1643, %v1636
    %v1649 = vmul.f32 %v1643, %v1635
    %v1650 = vmul.f32 %v1643, %v1634
    %v1651 = vmul.f32 %v1643, %v1633
    %v1652 = vmul.f32 %v1643, %v1640
    %v1653 = vadd.f32 %v1609, %v1645
    %v1654 = vadd.f32 %v1610, %v1646
    %v1655 = vadd.f32 %v1611, %v1647
    %v1656 = vadd.f32 %v1612, %v1648
    %v1657 = vadd.f32 %v1613, %v1649
    %v1658 = vadd.f32 %v1614, %v1650
    %v1659 = vadd.f32 %v1615, %v1651
    %v1660 = vadd.f32 %v1616, %v1652
    %1661 = vrot.lane.b32.xlu0 %v1338, 63
    %v1662 = vpop.permute.xlu0 %1661
    %1663 = vrot.lane.b32.xlu0 %v1342, 63
    %v1664 = vpop.permute.xlu0 %1663
    %1665 = vrot.lane.b32.xlu0 %v1346, 63
    %v1666 = vpop.permute.xlu0 %1665
    %1667 = vrot.lane.b32.xlu0 %v1350, 63
    %v1668 = vpop.permute.xlu0 %1667
    %1669 = vrot.lane.b32.xlu0 %v1354, 63
    %v1670 = vpop.permute.xlu0 %1669
    %1671 = vrot.lane.b32.xlu0 %v1358, 63
    %v1672 = vpop.permute.xlu0 %1671
    %1673 = vrot.lane.b32.xlu0 %v1362, 63
    %v1674 = vpop.permute.xlu0 %1673
    %1675 = vrot.lane.b32.xlu0 %v1366, 63
    %v1676 = vpop.permute.xlu0 %1675
    %v1677 = vsel %vm380, %v1674, %v1676
    %v1678 = vsel %vm380, %v1672, %v1674
    %v1679 = vsel %vm380, %v1670, %v1672
    %v1680 = vsel %vm380, %v1668, %v1670
    %v1681 = vsel %vm380, %v1666, %v1668
    %v1682 = vsel %vm380, %v1664, %v1666
    %v1683 = vsel %vm380, %v1662, %v1664
    %v1684 = vsel %vm380, %v1676, %v1662
    %1685 = vset.pattern.permute.xlu0 7
    %1686 = vperm.xlu0 %1685, %v1375
    %v1687 = vpop.permute.xlu0 %1686
    %v1689 = vmul.f32 %v1687, %v1683
    %v1690 = vmul.f32 %v1687, %v1682
    %v1691 = vmul.f32 %v1687, %v1681
    %v1692 = vmul.f32 %v1687, %v1680
    %v1693 = vmul.f32 %v1687, %v1679
    %v1694 = vmul.f32 %v1687, %v1678
    %v1695 = vmul.f32 %v1687, %v1677
    %v1696 = vmul.f32 %v1687, %v1684
    %v1697 = vadd.f32 %v1653, %v1689
    %v1698 = vadd.f32 %v1654, %v1690
    %v1699 = vadd.f32 %v1655, %v1691
    %v1700 = vadd.f32 %v1656, %v1692
    %v1701 = vadd.f32 %v1657, %v1693
    %v1702 = vadd.f32 %v1658, %v1694
    %v1703 = vadd.f32 %v1659, %v1695
    %v1704 = vadd.f32 %v1660, %v1696
    %1705 = vrot.lane.b32.xlu0 %v1338, 62
    %v1706 = vpop.permute.xlu0 %1705
    %1707 = vrot.lane.b32.xlu0 %v1342, 62
    %v1708 = vpop.permute.xlu0 %1707
    %1709 = vrot.lane.b32.xlu0 %v1346, 62
    %v1710 = vpop.permute.xlu0 %1709
    %1711 = vrot.lane.b32.xlu0 %v1350, 62
    %v1712 = vpop.permute.xlu0 %1711
    %1713 = vrot.lane.b32.xlu0 %v1354, 62
    %v1714 = vpop.permute.xlu0 %1713
    %1715 = vrot.lane.b32.xlu0 %v1358, 62
    %v1716 = vpop.permute.xlu0 %1715
    %1717 = vrot.lane.b32.xlu0 %v1362, 62
    %v1718 = vpop.permute.xlu0 %1717
    %1719 = vrot.lane.b32.xlu0 %v1366, 62
    %v1720 = vpop.permute.xlu0 %1719
    %v1721 = vsel %vm425, %v1718, %v1720
    %v1722 = vsel %vm425, %v1716, %v1718
    %v1723 = vsel %vm425, %v1714, %v1716
    %v1724 = vsel %vm425, %v1712, %v1714
    %v1725 = vsel %vm425, %v1710, %v1712
    %v1726 = vsel %vm425, %v1708, %v1710
    %v1727 = vsel %vm425, %v1706, %v1708
    %v1728 = vsel %vm425, %v1720, %v1706
    %1729 = vset.pattern.permute.xlu0 8
    %1730 = vperm.xlu0 %1729, %v1375
    %v1731 = vpop.permute.xlu0 %1730
    %v1733 = vmul.f32 %v1731, %v1727
    %v1734 = vmul.f32 %v1731, %v1726
    %v1735 = vmul.f32 %v1731, %v1725
    %v1736 = vmul.f32 %v1731, %v1724
    %v1737 = vmul.f32 %v1731, %v1723
    %v1738 = vmul.f32 %v1731, %v1722
    %v1739 = vmul.f32 %v1731, %v1721
    %v1740 = vmul.f32 %v1731, %v1728
    %v1741 = vadd.f32 %v1697, %v1733
    %v1742 = vadd.f32 %v1698, %v1734
    %v1743 = vadd.f32 %v1699, %v1735
    %v1744 = vadd.f32 %v1700, %v1736
    %v1745 = vadd.f32 %v1701, %v1737
    %v1746 = vadd.f32 %v1702, %v1738
    %v1747 = vadd.f32 %v1703, %v1739
    %v1748 = vadd.f32 %v1704, %v1740
    %s1749 = scalar_lea.vmem [#allocation2], 4
    %v1750 = vld [vmem:[%s1749] ss:$8 sm:$0xf]
    %v1751 = vld [vmem:[%s1749] ss:$8 sm:$0xf0]
    %v1752 = vor.u32 %v1750, %v1751
    %v1754 = vlaneseq
    %v1755 = vshrl.u32 %v1754, 7
    %v1756 = vsub.s32 0, %v1755
    %v1757 = vrot.slane %v1752, %v1756
    %v1758 = vlaneseq
    %v1759 = vshrl.u32 %v1758, 7
    %v1760 = vsub.s32 1, %v1759
    %v1761 = vrot.slane %v1752, %v1760
    %v1762 = vlaneseq
    %v1763 = vshrl.u32 %v1762, 7
    %v1764 = vsub.s32 2, %v1763
    %v1765 = vrot.slane %v1752, %v1764
    %v1766 = vlaneseq
    %v1767 = vshrl.u32 %v1766, 7
    %v1768 = vsub.s32 3, %v1767
    %v1769 = vrot.slane %v1752, %v1768
    %v1770 = vlaneseq
    %v1771 = vshrl.u32 %v1770, 7
    %v1772 = vsub.s32 4, %v1771
    %v1773 = vrot.slane %v1752, %v1772
    %v1774 = vlaneseq
    %v1775 = vshrl.u32 %v1774, 7
    %v1776 = vsub.s32 5, %v1775
    %v1777 = vrot.slane %v1752, %v1776
    %v1778 = vlaneseq
    %v1779 = vshrl.u32 %v1778, 7
    %v1780 = vsub.s32 6, %v1779
    %v1781 = vrot.slane %v1752, %v1780
    %v1782 = vlaneseq
    %v1783 = vshrl.u32 %v1782, 7
    %v1784 = vsub.s32 7, %v1783
    %v1785 = vrot.slane %v1752, %v1784
    %1794 = vset.pattern.permute.xlu0 9
    %1795 = vperm.xlu0 %1794, %v1375
    %v1796 = vpop.permute.xlu0 %1795
    %v1798 = vmul.f32 %v1796, %v1757
    %v1799 = vmul.f32 %v1796, %v1761
    %v1800 = vmul.f32 %v1796, %v1765
    %v1801 = vmul.f32 %v1796, %v1769
    %v1802 = vmul.f32 %v1796, %v1773
    %v1803 = vmul.f32 %v1796, %v1777
    %v1804 = vmul.f32 %v1796, %v1781
    %v1805 = vmul.f32 %v1796, %v1785
    %v1806 = vadd.f32 %v1741, %v1798
    %v1807 = vadd.f32 %v1742, %v1799
    %v1808 = vadd.f32 %v1743, %v1800
    %v1809 = vadd.f32 %v1744, %v1801
    %v1810 = vadd.f32 %v1745, %v1802
    %v1811 = vadd.f32 %v1746, %v1803
    %v1812 = vadd.f32 %v1747, %v1804
    %v1813 = vadd.f32 %v1748, %v1805
    %1814 = vrot.lane.b32.xlu0 %v1757, 127
    %v1815 = vpop.permute.xlu0 %1814
    %1816 = vrot.lane.b32.xlu0 %v1761, 127
    %v1817 = vpop.permute.xlu0 %1816
    %1818 = vrot.lane.b32.xlu0 %v1765, 127
    %v1819 = vpop.permute.xlu0 %1818
    %1820 = vrot.lane.b32.xlu0 %v1769, 127
    %v1821 = vpop.permute.xlu0 %1820
    %1822 = vrot.lane.b32.xlu0 %v1773, 127
    %v1823 = vpop.permute.xlu0 %1822
    %1824 = vrot.lane.b32.xlu0 %v1777, 127
    %v1825 = vpop.permute.xlu0 %1824
    %1826 = vrot.lane.b32.xlu0 %v1781, 127
    %v1827 = vpop.permute.xlu0 %1826
    %1828 = vrot.lane.b32.xlu0 %v1785, 127
    %v1829 = vpop.permute.xlu0 %1828
    %v1830 = vsel %vm110, %v1827, %v1829
    %v1831 = vsel %vm110, %v1825, %v1827
    %v1832 = vsel %vm110, %v1823, %v1825
    %v1833 = vsel %vm110, %v1821, %v1823
    %v1834 = vsel %vm110, %v1819, %v1821
    %v1835 = vsel %vm110, %v1817, %v1819
    %v1836 = vsel %vm110, %v1815, %v1817
    %v1837 = vsel %vm110, %v1829, %v1815
    %1838 = vset.pattern.permute.xlu0 10
    %1839 = vperm.xlu0 %1838, %v1375
    %v1840 = vpop.permute.xlu0 %1839
    %v1842 = vmul.f32 %v1840, %v1836
    %v1843 = vmul.f32 %v1840, %v1835
    %v1844 = vmul.f32 %v1840, %v1834
    %v1845 = vmul.f32 %v1840, %v1833
    %v1846 = vmul.f32 %v1840, %v1832
    %v1847 = vmul.f32 %v1840, %v1831
    %v1848 = vmul.f32 %v1840, %v1830
    %v1849 = vmul.f32 %v1840, %v1837
    %v1850 = vadd.f32 %v1806, %v1842
    %v1851 = vadd.f32 %v1807, %v1843
    %v1852 = vadd.f32 %v1808, %v1844
    %v1853 = vadd.f32 %v1809, %v1845
    %v1854 = vadd.f32 %v1810, %v1846
    %v1855 = vadd.f32 %v1811, %v1847
    %v1856 = vadd.f32 %v1812, %v1848
    %v1857 = vadd.f32 %v1813, %v1849
    %1858 = vrot.lane.b32.xlu0 %v1757, 126
    %v1859 = vpop.permute.xlu0 %1858
    %1860 = vrot.lane.b32.xlu0 %v1761, 126
    %v1861 = vpop.permute.xlu0 %1860
    %1862 = vrot.lane.b32.xlu0 %v1765, 126
    %v1863 = vpop.permute.xlu0 %1862
    %1864 = vrot.lane.b32.xlu0 %v1769, 126
    %v1865 = vpop.permute.xlu0 %1864
    %1866 = vrot.lane.b32.xlu0 %v1773, 126
    %v1867 = vpop.permute.xlu0 %1866
    %1868 = vrot.lane.b32.xlu0 %v1777, 126
    %v1869 = vpop.permute.xlu0 %1868
    %1870 = vrot.lane.b32.xlu0 %v1781, 126
    %v1871 = vpop.permute.xlu0 %1870
    %1872 = vrot.lane.b32.xlu0 %v1785, 126
    %v1873 = vpop.permute.xlu0 %1872
    %v1874 = vsel %vm155, %v1871, %v1873
    %v1875 = vsel %vm155, %v1869, %v1871
    %v1876 = vsel %vm155, %v1867, %v1869
    %v1877 = vsel %vm155, %v1865, %v1867
    %v1878 = vsel %vm155, %v1863, %v1865
    %v1879 = vsel %vm155, %v1861, %v1863
    %v1880 = vsel %vm155, %v1859, %v1861
    %v1881 = vsel %vm155, %v1873, %v1859
    %1882 = vset.pattern.permute.xlu0 11
    %1883 = vperm.xlu0 %1882, %v1375
    %v1884 = vpop.permute.xlu0 %1883
    %v1886 = vmul.f32 %v1884, %v1880
    %v1887 = vmul.f32 %v1884, %v1879
    %v1888 = vmul.f32 %v1884, %v1878
    %v1889 = vmul.f32 %v1884, %v1877
    %v1890 = vmul.f32 %v1884, %v1876
    %v1891 = vmul.f32 %v1884, %v1875
    %v1892 = vmul.f32 %v1884, %v1874
    %v1893 = vmul.f32 %v1884, %v1881
    %v1894 = vadd.f32 %v1850, %v1886
    %v1895 = vadd.f32 %v1851, %v1887
    %v1896 = vadd.f32 %v1852, %v1888
    %v1897 = vadd.f32 %v1853, %v1889
    %v1898 = vadd.f32 %v1854, %v1890
    %v1899 = vadd.f32 %v1855, %v1891
    %v1900 = vadd.f32 %v1856, %v1892
    %v1901 = vadd.f32 %v1857, %v1893
    %1902 = vrot.lane.b32.xlu0 %v1757, 96
    %v1903 = vpop.permute.xlu0 %1902
    %1904 = vrot.lane.b32.xlu0 %v1761, 96
    %v1905 = vpop.permute.xlu0 %1904
    %1906 = vrot.lane.b32.xlu0 %v1765, 96
    %v1907 = vpop.permute.xlu0 %1906
    %1908 = vrot.lane.b32.xlu0 %v1769, 96
    %v1909 = vpop.permute.xlu0 %1908
    %1910 = vrot.lane.b32.xlu0 %v1773, 96
    %v1911 = vpop.permute.xlu0 %1910
    %1912 = vrot.lane.b32.xlu0 %v1777, 96
    %v1913 = vpop.permute.xlu0 %1912
    %1914 = vrot.lane.b32.xlu0 %v1781, 96
    %v1915 = vpop.permute.xlu0 %1914
    %1916 = vrot.lane.b32.xlu0 %v1785, 96
    %v1917 = vpop.permute.xlu0 %1916
    %v1918 = vsel %vm200, %v1915, %v1917
    %v1919 = vsel %vm200, %v1913, %v1915
    %v1920 = vsel %vm200, %v1911, %v1913
    %v1921 = vsel %vm200, %v1909, %v1911
    %v1922 = vsel %vm200, %v1907, %v1909
    %v1923 = vsel %vm200, %v1905, %v1907
    %v1924 = vsel %vm200, %v1903, %v1905
    %v1925 = vsel %vm200, %v1917, %v1903
    %1926 = vset.pattern.permute.xlu0 12
    %1927 = vperm.xlu0 %1926, %v1375
    %v1928 = vpop.permute.xlu0 %1927
    %v1930 = vmul.f32 %v1928, %v1924
    %v1931 = vmul.f32 %v1928, %v1923
    %v1932 = vmul.f32 %v1928, %v1922
    %v1933 = vmul.f32 %v1928, %v1921
    %v1934 = vmul.f32 %v1928, %v1920
    %v1935 = vmul.f32 %v1928, %v1919
    %v1936 = vmul.f32 %v1928, %v1918
    %v1937 = vmul.f32 %v1928, %v1925
    %v1938 = vadd.f32 %v1894, %v1930
    %v1939 = vadd.f32 %v1895, %v1931
    %v1940 = vadd.f32 %v1896, %v1932
    %v1941 = vadd.f32 %v1897, %v1933
    %v1942 = vadd.f32 %v1898, %v1934
    %v1943 = vadd.f32 %v1899, %v1935
    %v1944 = vadd.f32 %v1900, %v1936
    %v1945 = vadd.f32 %v1901, %v1937
    %1946 = vrot.lane.b32.xlu0 %v1757, 95
    %v1947 = vpop.permute.xlu0 %1946
    %1948 = vrot.lane.b32.xlu0 %v1761, 95
    %v1949 = vpop.permute.xlu0 %1948
    %1950 = vrot.lane.b32.xlu0 %v1765, 95
    %v1951 = vpop.permute.xlu0 %1950
    %1952 = vrot.lane.b32.xlu0 %v1769, 95
    %v1953 = vpop.permute.xlu0 %1952
    %1954 = vrot.lane.b32.xlu0 %v1773, 95
    %v1955 = vpop.permute.xlu0 %1954
    %1956 = vrot.lane.b32.xlu0 %v1777, 95
    %v1957 = vpop.permute.xlu0 %1956
    %1958 = vrot.lane.b32.xlu0 %v1781, 95
    %v1959 = vpop.permute.xlu0 %1958
    %1960 = vrot.lane.b32.xlu0 %v1785, 95
    %v1961 = vpop.permute.xlu0 %1960
    %v1962 = vsel %vm245, %v1959, %v1961
    %v1963 = vsel %vm245, %v1957, %v1959
    %v1964 = vsel %vm245, %v1955, %v1957
    %v1965 = vsel %vm245, %v1953, %v1955
    %v1966 = vsel %vm245, %v1951, %v1953
    %v1967 = vsel %vm245, %v1949, %v1951
    %v1968 = vsel %vm245, %v1947, %v1949
    %v1969 = vsel %vm245, %v1961, %v1947
    %1970 = vset.pattern.permute.xlu0 13
    %1971 = vperm.xlu0 %1970, %v1375
    %v1972 = vpop.permute.xlu0 %1971
    %v1974 = vmul.f32 %v1972, %v1968
    %v1975 = vmul.f32 %v1972, %v1967
    %v1976 = vmul.f32 %v1972, %v1966
    %v1977 = vmul.f32 %v1972, %v1965
    %v1978 = vmul.f32 %v1972, %v1964
    %v1979 = vmul.f32 %v1972, %v1963
    %v1980 = vmul.f32 %v1972, %v1962
    %v1981 = vmul.f32 %v1972, %v1969
    %v1982 = vadd.f32 %v1938, %v1974
    %v1983 = vadd.f32 %v1939, %v1975
    %v1984 = vadd.f32 %v1940, %v1976
    %v1985 = vadd.f32 %v1941, %v1977
    %v1986 = vadd.f32 %v1942, %v1978
    %v1987 = vadd.f32 %v1943, %v1979
    %v1988 = vadd.f32 %v1944, %v1980
    %v1989 = vadd.f32 %v1945, %v1981
    %1990 = vrot.lane.b32.xlu0 %v1757, 94
    %v1991 = vpop.permute.xlu0 %1990
    %1992 = vrot.lane.b32.xlu0 %v1761, 94
    %v1993 = vpop.permute.xlu0 %1992
    %1994 = vrot.lane.b32.xlu0 %v1765, 94
    %v1995 = vpop.permute.xlu0 %1994
    %1996 = vrot.lane.b32.xlu0 %v1769, 94
    %v1997 = vpop.permute.xlu0 %1996
    %1998 = vrot.lane.b32.xlu0 %v1773, 94
    %v1999 = vpop.permute.xlu0 %1998
    %2000 = vrot.lane.b32.xlu0 %v1777, 94
    %v2001 = vpop.permute.xlu0 %2000
    %2002 = vrot.lane.b32.xlu0 %v1781, 94
    %v2003 = vpop.permute.xlu0 %2002
    %2004 = vrot.lane.b32.xlu0 %v1785, 94
    %v2005 = vpop.permute.xlu0 %2004
    %v2006 = vsel %vm290, %v2003, %v2005
    %v2007 = vsel %vm290, %v2001, %v2003
    %v2008 = vsel %vm290, %v1999, %v2001
    %v2009 = vsel %vm290, %v1997, %v1999
    %v2010 = vsel %vm290, %v1995, %v1997
    %v2011 = vsel %vm290, %v1993, %v1995
    %v2012 = vsel %vm290, %v1991, %v1993
    %v2013 = vsel %vm290, %v2005, %v1991
    %2014 = vset.pattern.permute.xlu0 14
    %2015 = vperm.xlu0 %2014, %v1375
    %v2016 = vpop.permute.xlu0 %2015
    %v2018 = vmul.f32 %v2016, %v2012
    %v2019 = vmul.f32 %v2016, %v2011
    %v2020 = vmul.f32 %v2016, %v2010
    %v2021 = vmul.f32 %v2016, %v2009
    %v2022 = vmul.f32 %v2016, %v2008
    %v2023 = vmul.f32 %v2016, %v2007
    %v2024 = vmul.f32 %v2016, %v2006
    %v2025 = vmul.f32 %v2016, %v2013
    %v2026 = vadd.f32 %v1982, %v2018
    %v2027 = vadd.f32 %v1983, %v2019
    %v2028 = vadd.f32 %v1984, %v2020
    %v2029 = vadd.f32 %v1985, %v2021
    %v2030 = vadd.f32 %v1986, %v2022
    %v2031 = vadd.f32 %v1987, %v2023
    %v2032 = vadd.f32 %v1988, %v2024
    %v2033 = vadd.f32 %v1989, %v2025
    %2034 = vrot.lane.b32.xlu0 %v1757, 64
    %v2035 = vpop.permute.xlu0 %2034
    %2036 = vrot.lane.b32.xlu0 %v1761, 64
    %v2037 = vpop.permute.xlu0 %2036
    %2038 = vrot.lane.b32.xlu0 %v1765, 64
    %v2039 = vpop.permute.xlu0 %2038
    %2040 = vrot.lane.b32.xlu0 %v1769, 64
    %v2041 = vpop.permute.xlu0 %2040
    %2042 = vrot.lane.b32.xlu0 %v1773, 64
    %v2043 = vpop.permute.xlu0 %2042
    %2044 = vrot.lane.b32.xlu0 %v1777, 64
    %v2045 = vpop.permute.xlu0 %2044
    %2046 = vrot.lane.b32.xlu0 %v1781, 64
    %v2047 = vpop.permute.xlu0 %2046
    %2048 = vrot.lane.b32.xlu0 %v1785, 64
    %v2049 = vpop.permute.xlu0 %2048
    %v2050 = vsel %vm335, %v2047, %v2049
    %v2051 = vsel %vm335, %v2045, %v2047
    %v2052 = vsel %vm335, %v2043, %v2045
    %v2053 = vsel %vm335, %v2041, %v2043
    %v2054 = vsel %vm335, %v2039, %v2041
    %v2055 = vsel %vm335, %v2037, %v2039
    %v2056 = vsel %vm335, %v2035, %v2037
    %v2057 = vsel %vm335, %v2049, %v2035
    %2058 = vset.pattern.permute.xlu0 15
    %2059 = vperm.xlu0 %2058, %v1375
    %v2060 = vpop.permute.xlu0 %2059
    %v2062 = vmul.f32 %v2060, %v2056
    %v2063 = vmul.f32 %v2060, %v2055
    %v2064 = vmul.f32 %v2060, %v2054
    %v2065 = vmul.f32 %v2060, %v2053
    %v2066 = vmul.f32 %v2060, %v2052
    %v2067 = vmul.f32 %v2060, %v2051
    %v2068 = vmul.f32 %v2060, %v2050
    %v2069 = vmul.f32 %v2060, %v2057
    %v2070 = vadd.f32 %v2026, %v2062
    %v2071 = vadd.f32 %v2027, %v2063
    %v2072 = vadd.f32 %v2028, %v2064
    %v2073 = vadd.f32 %v2029, %v2065
    %v2074 = vadd.f32 %v2030, %v2066
    %v2075 = vadd.f32 %v2031, %v2067
    %v2076 = vadd.f32 %v2032, %v2068
    %v2077 = vadd.f32 %v2033, %v2069
    %2078 = vrot.lane.b32.xlu0 %v1757, 63
    %v2079 = vpop.permute.xlu0 %2078
    %2080 = vrot.lane.b32.xlu0 %v1761, 63
    %v2081 = vpop.permute.xlu0 %2080
    %2082 = vrot.lane.b32.xlu0 %v1765, 63
    %v2083 = vpop.permute.xlu0 %2082
    %2084 = vrot.lane.b32.xlu0 %v1769, 63
    %v2085 = vpop.permute.xlu0 %2084
    %2086 = vrot.lane.b32.xlu0 %v1773, 63
    %v2087 = vpop.permute.xlu0 %2086
    %2088 = vrot.lane.b32.xlu0 %v1777, 63
    %v2089 = vpop.permute.xlu0 %2088
    %2090 = vrot.lane.b32.xlu0 %v1781, 63
    %v2091 = vpop.permute.xlu0 %2090
    %2092 = vrot.lane.b32.xlu0 %v1785, 63
    %v2093 = vpop.permute.xlu0 %2092
    %v2094 = vsel %vm380, %v2091, %v2093
    %v2095 = vsel %vm380, %v2089, %v2091
    %v2096 = vsel %vm380, %v2087, %v2089
    %v2097 = vsel %vm380, %v2085, %v2087
    %v2098 = vsel %vm380, %v2083, %v2085
    %v2099 = vsel %vm380, %v2081, %v2083
    %v2100 = vsel %vm380, %v2079, %v2081
    %v2101 = vsel %vm380, %v2093, %v2079
    %2102 = vset.pattern.permute.xlu0 16
    %2103 = vperm.xlu0 %2102, %v1375
    %v2104 = vpop.permute.xlu0 %2103
    %v2106 = vmul.f32 %v2104, %v2100
    %v2107 = vmul.f32 %v2104, %v2099
    %v2108 = vmul.f32 %v2104, %v2098
    %v2109 = vmul.f32 %v2104, %v2097
    %v2110 = vmul.f32 %v2104, %v2096
    %v2111 = vmul.f32 %v2104, %v2095
    %v2112 = vmul.f32 %v2104, %v2094
    %v2113 = vmul.f32 %v2104, %v2101
    %v2114 = vadd.f32 %v2070, %v2106
    %v2115 = vadd.f32 %v2071, %v2107
    %v2116 = vadd.f32 %v2072, %v2108
    %v2117 = vadd.f32 %v2073, %v2109
    %v2118 = vadd.f32 %v2074, %v2110
    %v2119 = vadd.f32 %v2075, %v2111
    %v2120 = vadd.f32 %v2076, %v2112
    %v2121 = vadd.f32 %v2077, %v2113
    %2122 = vrot.lane.b32.xlu0 %v1757, 62
    %v2123 = vpop.permute.xlu0 %2122
    %2124 = vrot.lane.b32.xlu0 %v1761, 62
    %v2125 = vpop.permute.xlu0 %2124
    %2126 = vrot.lane.b32.xlu0 %v1765, 62
    %v2127 = vpop.permute.xlu0 %2126
    %2128 = vrot.lane.b32.xlu0 %v1769, 62
    %v2129 = vpop.permute.xlu0 %2128
    %2130 = vrot.lane.b32.xlu0 %v1773, 62
    %v2131 = vpop.permute.xlu0 %2130
    %2132 = vrot.lane.b32.xlu0 %v1777, 62
    %v2133 = vpop.permute.xlu0 %2132
    %2134 = vrot.lane.b32.xlu0 %v1781, 62
    %v2135 = vpop.permute.xlu0 %2134
    %2136 = vrot.lane.b32.xlu0 %v1785, 62
    %v2137 = vpop.permute.xlu0 %2136
    %v2138 = vsel %vm425, %v2135, %v2137
    %v2139 = vsel %vm425, %v2133, %v2135
    %v2140 = vsel %vm425, %v2131, %v2133
    %v2141 = vsel %vm425, %v2129, %v2131
    %v2142 = vsel %vm425, %v2127, %v2129
    %v2143 = vsel %vm425, %v2125, %v2127
    %v2144 = vsel %vm425, %v2123, %v2125
    %v2145 = vsel %vm425, %v2137, %v2123
    %2146 = vset.pattern.permute.xlu0 17
    %2147 = vperm.xlu0 %2146, %v1375
    %v2148 = vpop.permute.xlu0 %2147
    %v2150 = vmul.f32 %v2148, %v2144
    %v2151 = vmul.f32 %v2148, %v2143
    %v2152 = vmul.f32 %v2148, %v2142
    %v2153 = vmul.f32 %v2148, %v2141
    %v2154 = vmul.f32 %v2148, %v2140
    %v2155 = vmul.f32 %v2148, %v2139
    %v2156 = vmul.f32 %v2148, %v2138
    %v2157 = vmul.f32 %v2148, %v2145
    %v2158 = vadd.f32 %v2114, %v2150
    %v2159 = vadd.f32 %v2115, %v2151
    %v2160 = vadd.f32 %v2116, %v2152
    %v2161 = vadd.f32 %v2117, %v2153
    %v2162 = vadd.f32 %v2118, %v2154
    %v2163 = vadd.f32 %v2119, %v2155
    %v2164 = vadd.f32 %v2120, %v2156
    %v2165 = vadd.f32 %v2121, %v2157
    %s2166 = scalar_lea.vmem [#allocation2], 5
    %v2167 = vld [vmem:[%s2166] ss:$8 sm:$0xf]
    %v2168 = vld [vmem:[%s2166] ss:$8 sm:$0xf0]
    %v2169 = vor.u32 %v2167, %v2168
    %v2171 = vlaneseq
    %v2172 = vshrl.u32 %v2171, 7
    %v2173 = vsub.s32 0, %v2172
    %v2174 = vrot.slane %v2169, %v2173
    %v2175 = vlaneseq
    %v2176 = vshrl.u32 %v2175, 7
    %v2177 = vsub.s32 1, %v2176
    %v2178 = vrot.slane %v2169, %v2177
    %v2179 = vlaneseq
    %v2180 = vshrl.u32 %v2179, 7
    %v2181 = vsub.s32 2, %v2180
    %v2182 = vrot.slane %v2169, %v2181
    %v2183 = vlaneseq
    %v2184 = vshrl.u32 %v2183, 7
    %v2185 = vsub.s32 3, %v2184
    %v2186 = vrot.slane %v2169, %v2185
    %v2187 = vlaneseq
    %v2188 = vshrl.u32 %v2187, 7
    %v2189 = vsub.s32 4, %v2188
    %v2190 = vrot.slane %v2169, %v2189
    %v2191 = vlaneseq
    %v2192 = vshrl.u32 %v2191, 7
    %v2193 = vsub.s32 5, %v2192
    %v2194 = vrot.slane %v2169, %v2193
    %v2195 = vlaneseq
    %v2196 = vshrl.u32 %v2195, 7
    %v2197 = vsub.s32 6, %v2196
    %v2198 = vrot.slane %v2169, %v2197
    %v2199 = vlaneseq
    %v2200 = vshrl.u32 %v2199, 7
    %v2201 = vsub.s32 7, %v2200
    %v2202 = vrot.slane %v2169, %v2201
    %2211 = vset.pattern.permute.xlu0 18
    %2212 = vperm.xlu0 %2211, %v1375
    %v2213 = vpop.permute.xlu0 %2212
    %v2215 = vmul.f32 %v2213, %v2174
    %v2216 = vmul.f32 %v2213, %v2178
    %v2217 = vmul.f32 %v2213, %v2182
    %v2218 = vmul.f32 %v2213, %v2186
    %v2219 = vmul.f32 %v2213, %v2190
    %v2220 = vmul.f32 %v2213, %v2194
    %v2221 = vmul.f32 %v2213, %v2198
    %v2222 = vmul.f32 %v2213, %v2202
    %v2223 = vadd.f32 %v2158, %v2215
    %v2224 = vadd.f32 %v2159, %v2216
    %v2225 = vadd.f32 %v2160, %v2217
    %v2226 = vadd.f32 %v2161, %v2218
    %v2227 = vadd.f32 %v2162, %v2219
    %v2228 = vadd.f32 %v2163, %v2220
    %v2229 = vadd.f32 %v2164, %v2221
    %v2230 = vadd.f32 %v2165, %v2222
    %2231 = vrot.lane.b32.xlu0 %v2174, 127
    %v2232 = vpop.permute.xlu0 %2231
    %2233 = vrot.lane.b32.xlu0 %v2178, 127
    %v2234 = vpop.permute.xlu0 %2233
    %2235 = vrot.lane.b32.xlu0 %v2182, 127
    %v2236 = vpop.permute.xlu0 %2235
    %2237 = vrot.lane.b32.xlu0 %v2186, 127
    %v2238 = vpop.permute.xlu0 %2237
    %2239 = vrot.lane.b32.xlu0 %v2190, 127
    %v2240 = vpop.permute.xlu0 %2239
    %2241 = vrot.lane.b32.xlu0 %v2194, 127
    %v2242 = vpop.permute.xlu0 %2241
    %2243 = vrot.lane.b32.xlu0 %v2198, 127
    %v2244 = vpop.permute.xlu0 %2243
    %2245 = vrot.lane.b32.xlu0 %v2202, 127
    %v2246 = vpop.permute.xlu0 %2245
    %v2247 = vsel %vm110, %v2244, %v2246
    %v2248 = vsel %vm110, %v2242, %v2244
    %v2249 = vsel %vm110, %v2240, %v2242
    %v2250 = vsel %vm110, %v2238, %v2240
    %v2251 = vsel %vm110, %v2236, %v2238
    %v2252 = vsel %vm110, %v2234, %v2236
    %v2253 = vsel %vm110, %v2232, %v2234
    %v2254 = vsel %vm110, %v2246, %v2232
    %2255 = vset.pattern.permute.xlu0 19
    %2256 = vperm.xlu0 %2255, %v1375
    %v2257 = vpop.permute.xlu0 %2256
    %v2259 = vmul.f32 %v2257, %v2253
    %v2260 = vmul.f32 %v2257, %v2252
    %v2261 = vmul.f32 %v2257, %v2251
    %v2262 = vmul.f32 %v2257, %v2250
    %v2263 = vmul.f32 %v2257, %v2249
    %v2264 = vmul.f32 %v2257, %v2248
    %v2265 = vmul.f32 %v2257, %v2247
    %v2266 = vmul.f32 %v2257, %v2254
    %v2267 = vadd.f32 %v2223, %v2259
    %v2268 = vadd.f32 %v2224, %v2260
    %v2269 = vadd.f32 %v2225, %v2261
    %v2270 = vadd.f32 %v2226, %v2262
    %v2271 = vadd.f32 %v2227, %v2263
    %v2272 = vadd.f32 %v2228, %v2264
    %v2273 = vadd.f32 %v2229, %v2265
    %v2274 = vadd.f32 %v2230, %v2266
    %2275 = vrot.lane.b32.xlu0 %v2174, 126
    %v2276 = vpop.permute.xlu0 %2275
    %2277 = vrot.lane.b32.xlu0 %v2178, 126
    %v2278 = vpop.permute.xlu0 %2277
    %2279 = vrot.lane.b32.xlu0 %v2182, 126
    %v2280 = vpop.permute.xlu0 %2279
    %2281 = vrot.lane.b32.xlu0 %v2186, 126
    %v2282 = vpop.permute.xlu0 %2281
    %2283 = vrot.lane.b32.xlu0 %v2190, 126
    %v2284 = vpop.permute.xlu0 %2283
    %2285 = vrot.lane.b32.xlu0 %v2194, 126
    %v2286 = vpop.permute.xlu0 %2285
    %2287 = vrot.lane.b32.xlu0 %v2198, 126
    %v2288 = vpop.permute.xlu0 %2287
    %2289 = vrot.lane.b32.xlu0 %v2202, 126
    %v2290 = vpop.permute.xlu0 %2289
    %v2291 = vsel %vm155, %v2288, %v2290
    %v2292 = vsel %vm155, %v2286, %v2288
    %v2293 = vsel %vm155, %v2284, %v2286
    %v2294 = vsel %vm155, %v2282, %v2284
    %v2295 = vsel %vm155, %v2280, %v2282
    %v2296 = vsel %vm155, %v2278, %v2280
    %v2297 = vsel %vm155, %v2276, %v2278
    %v2298 = vsel %vm155, %v2290, %v2276
    %2299 = vset.pattern.permute.xlu0 20
    %2300 = vperm.xlu0 %2299, %v1375
    %v2301 = vpop.permute.xlu0 %2300
    %v2303 = vmul.f32 %v2301, %v2297
    %v2304 = vmul.f32 %v2301, %v2296
    %v2305 = vmul.f32 %v2301, %v2295
    %v2306 = vmul.f32 %v2301, %v2294
    %v2307 = vmul.f32 %v2301, %v2293
    %v2308 = vmul.f32 %v2301, %v2292
    %v2309 = vmul.f32 %v2301, %v2291
    %v2310 = vmul.f32 %v2301, %v2298
    %v2311 = vadd.f32 %v2267, %v2303
    %v2312 = vadd.f32 %v2268, %v2304
    %v2313 = vadd.f32 %v2269, %v2305
    %v2314 = vadd.f32 %v2270, %v2306
    %v2315 = vadd.f32 %v2271, %v2307
    %v2316 = vadd.f32 %v2272, %v2308
    %v2317 = vadd.f32 %v2273, %v2309
    %v2318 = vadd.f32 %v2274, %v2310
    %2319 = vrot.lane.b32.xlu0 %v2174, 96
    %v2320 = vpop.permute.xlu0 %2319
    %2321 = vrot.lane.b32.xlu0 %v2178, 96
    %v2322 = vpop.permute.xlu0 %2321
    %2323 = vrot.lane.b32.xlu0 %v2182, 96
    %v2324 = vpop.permute.xlu0 %2323
    %2325 = vrot.lane.b32.xlu0 %v2186, 96
    %v2326 = vpop.permute.xlu0 %2325
    %2327 = vrot.lane.b32.xlu0 %v2190, 96
    %v2328 = vpop.permute.xlu0 %2327
    %2329 = vrot.lane.b32.xlu0 %v2194, 96
    %v2330 = vpop.permute.xlu0 %2329
    %2331 = vrot.lane.b32.xlu0 %v2198, 96
    %v2332 = vpop.permute.xlu0 %2331
    %2333 = vrot.lane.b32.xlu0 %v2202, 96
    %v2334 = vpop.permute.xlu0 %2333
    %v2335 = vsel %vm200, %v2332, %v2334
    %v2336 = vsel %vm200, %v2330, %v2332
    %v2337 = vsel %vm200, %v2328, %v2330
    %v2338 = vsel %vm200, %v2326, %v2328
    %v2339 = vsel %vm200, %v2324, %v2326
    %v2340 = vsel %vm200, %v2322, %v2324
    %v2341 = vsel %vm200, %v2320, %v2322
    %v2342 = vsel %vm200, %v2334, %v2320
    %2343 = vset.pattern.permute.xlu0 21
    %2344 = vperm.xlu0 %2343, %v1375
    %v2345 = vpop.permute.xlu0 %2344
    %v2347 = vmul.f32 %v2345, %v2341
    %v2348 = vmul.f32 %v2345, %v2340
    %v2349 = vmul.f32 %v2345, %v2339
    %v2350 = vmul.f32 %v2345, %v2338
    %v2351 = vmul.f32 %v2345, %v2337
    %v2352 = vmul.f32 %v2345, %v2336
    %v2353 = vmul.f32 %v2345, %v2335
    %v2354 = vmul.f32 %v2345, %v2342
    %v2355 = vadd.f32 %v2311, %v2347
    %v2356 = vadd.f32 %v2312, %v2348
    %v2357 = vadd.f32 %v2313, %v2349
    %v2358 = vadd.f32 %v2314, %v2350
    %v2359 = vadd.f32 %v2315, %v2351
    %v2360 = vadd.f32 %v2316, %v2352
    %v2361 = vadd.f32 %v2317, %v2353
    %v2362 = vadd.f32 %v2318, %v2354
    %2363 = vrot.lane.b32.xlu0 %v2174, 95
    %v2364 = vpop.permute.xlu0 %2363
    %2365 = vrot.lane.b32.xlu0 %v2178, 95
    %v2366 = vpop.permute.xlu0 %2365
    %2367 = vrot.lane.b32.xlu0 %v2182, 95
    %v2368 = vpop.permute.xlu0 %2367
    %2369 = vrot.lane.b32.xlu0 %v2186, 95
    %v2370 = vpop.permute.xlu0 %2369
    %2371 = vrot.lane.b32.xlu0 %v2190, 95
    %v2372 = vpop.permute.xlu0 %2371
    %2373 = vrot.lane.b32.xlu0 %v2194, 95
    %v2374 = vpop.permute.xlu0 %2373
    %2375 = vrot.lane.b32.xlu0 %v2198, 95
    %v2376 = vpop.permute.xlu0 %2375
    %2377 = vrot.lane.b32.xlu0 %v2202, 95
    %v2378 = vpop.permute.xlu0 %2377
    %v2379 = vsel %vm245, %v2376, %v2378
    %v2380 = vsel %vm245, %v2374, %v2376
    %v2381 = vsel %vm245, %v2372, %v2374
    %v2382 = vsel %vm245, %v2370, %v2372
    %v2383 = vsel %vm245, %v2368, %v2370
    %v2384 = vsel %vm245, %v2366, %v2368
    %v2385 = vsel %vm245, %v2364, %v2366
    %v2386 = vsel %vm245, %v2378, %v2364
    %2387 = vset.pattern.permute.xlu0 22
    %2388 = vperm.xlu0 %2387, %v1375
    %v2389 = vpop.permute.xlu0 %2388
    %v2391 = vmul.f32 %v2389, %v2385
    %v2392 = vmul.f32 %v2389, %v2384
    %v2393 = vmul.f32 %v2389, %v2383
    %v2394 = vmul.f32 %v2389, %v2382
    %v2395 = vmul.f32 %v2389, %v2381
    %v2396 = vmul.f32 %v2389, %v2380
    %v2397 = vmul.f32 %v2389, %v2379
    %v2398 = vmul.f32 %v2389, %v2386
    %v2399 = vadd.f32 %v2355, %v2391
    %v2400 = vadd.f32 %v2356, %v2392
    %v2401 = vadd.f32 %v2357, %v2393
    %v2402 = vadd.f32 %v2358, %v2394
    %v2403 = vadd.f32 %v2359, %v2395
    %v2404 = vadd.f32 %v2360, %v2396
    %v2405 = vadd.f32 %v2361, %v2397
    %v2406 = vadd.f32 %v2362, %v2398
    %2407 = vrot.lane.b32.xlu0 %v2174, 94
    %v2408 = vpop.permute.xlu0 %2407
    %2409 = vrot.lane.b32.xlu0 %v2178, 94
    %v2410 = vpop.permute.xlu0 %2409
    %2411 = vrot.lane.b32.xlu0 %v2182, 94
    %v2412 = vpop.permute.xlu0 %2411
    %2413 = vrot.lane.b32.xlu0 %v2186, 94
    %v2414 = vpop.permute.xlu0 %2413
    %2415 = vrot.lane.b32.xlu0 %v2190, 94
    %v2416 = vpop.permute.xlu0 %2415
    %2417 = vrot.lane.b32.xlu0 %v2194, 94
    %v2418 = vpop.permute.xlu0 %2417
    %2419 = vrot.lane.b32.xlu0 %v2198, 94
    %v2420 = vpop.permute.xlu0 %2419
    %2421 = vrot.lane.b32.xlu0 %v2202, 94
    %v2422 = vpop.permute.xlu0 %2421
    %v2423 = vsel %vm290, %v2420, %v2422
    %v2424 = vsel %vm290, %v2418, %v2420
    %v2425 = vsel %vm290, %v2416, %v2418
    %v2426 = vsel %vm290, %v2414, %v2416
    %v2427 = vsel %vm290, %v2412, %v2414
    %v2428 = vsel %vm290, %v2410, %v2412
    %v2429 = vsel %vm290, %v2408, %v2410
    %v2430 = vsel %vm290, %v2422, %v2408
    %2431 = vset.pattern.permute.xlu0 23
    %2432 = vperm.xlu0 %2431, %v1375
    %v2433 = vpop.permute.xlu0 %2432
    %v2435 = vmul.f32 %v2433, %v2429
    %v2436 = vmul.f32 %v2433, %v2428
    %v2437 = vmul.f32 %v2433, %v2427
    %v2438 = vmul.f32 %v2433, %v2426
    %v2439 = vmul.f32 %v2433, %v2425
    %v2440 = vmul.f32 %v2433, %v2424
    %v2441 = vmul.f32 %v2433, %v2423
    %v2442 = vmul.f32 %v2433, %v2430
    %v2443 = vadd.f32 %v2399, %v2435
    %v2444 = vadd.f32 %v2400, %v2436
    %v2445 = vadd.f32 %v2401, %v2437
    %v2446 = vadd.f32 %v2402, %v2438
    %v2447 = vadd.f32 %v2403, %v2439
    %v2448 = vadd.f32 %v2404, %v2440
    %v2449 = vadd.f32 %v2405, %v2441
    %v2450 = vadd.f32 %v2406, %v2442
    %2451 = vrot.lane.b32.xlu0 %v2174, 64
    %v2452 = vpop.permute.xlu0 %2451
    %2453 = vrot.lane.b32.xlu0 %v2178, 64
    %v2454 = vpop.permute.xlu0 %2453
    %2455 = vrot.lane.b32.xlu0 %v2182, 64
    %v2456 = vpop.permute.xlu0 %2455
    %2457 = vrot.lane.b32.xlu0 %v2186, 64
    %v2458 = vpop.permute.xlu0 %2457
    %2459 = vrot.lane.b32.xlu0 %v2190, 64
    %v2460 = vpop.permute.xlu0 %2459
    %2461 = vrot.lane.b32.xlu0 %v2194, 64
    %v2462 = vpop.permute.xlu0 %2461
    %2463 = vrot.lane.b32.xlu0 %v2198, 64
    %v2464 = vpop.permute.xlu0 %2463
    %2465 = vrot.lane.b32.xlu0 %v2202, 64
    %v2466 = vpop.permute.xlu0 %2465
    %v2467 = vsel %vm335, %v2464, %v2466
    %v2468 = vsel %vm335, %v2462, %v2464
    %v2469 = vsel %vm335, %v2460, %v2462
    %v2470 = vsel %vm335, %v2458, %v2460
    %v2471 = vsel %vm335, %v2456, %v2458
    %v2472 = vsel %vm335, %v2454, %v2456
    %v2473 = vsel %vm335, %v2452, %v2454
    %v2474 = vsel %vm335, %v2466, %v2452
    %2475 = vset.pattern.permute.xlu0 24
    %2476 = vperm.xlu0 %2475, %v1375
    %v2477 = vpop.permute.xlu0 %2476
    %v2479 = vmul.f32 %v2477, %v2473
    %v2480 = vmul.f32 %v2477, %v2472
    %v2481 = vmul.f32 %v2477, %v2471
    %v2482 = vmul.f32 %v2477, %v2470
    %v2483 = vmul.f32 %v2477, %v2469
    %v2484 = vmul.f32 %v2477, %v2468
    %v2485 = vmul.f32 %v2477, %v2467
    %v2486 = vmul.f32 %v2477, %v2474
    %v2487 = vadd.f32 %v2443, %v2479
    %v2488 = vadd.f32 %v2444, %v2480
    %v2489 = vadd.f32 %v2445, %v2481
    %v2490 = vadd.f32 %v2446, %v2482
    %v2491 = vadd.f32 %v2447, %v2483
    %v2492 = vadd.f32 %v2448, %v2484
    %v2493 = vadd.f32 %v2449, %v2485
    %v2494 = vadd.f32 %v2450, %v2486
    %2495 = vrot.lane.b32.xlu0 %v2174, 63
    %v2496 = vpop.permute.xlu0 %2495
    %2497 = vrot.lane.b32.xlu0 %v2178, 63
    %v2498 = vpop.permute.xlu0 %2497
    %2499 = vrot.lane.b32.xlu0 %v2182, 63
    %v2500 = vpop.permute.xlu0 %2499
    %2501 = vrot.lane.b32.xlu0 %v2186, 63
    %v2502 = vpop.permute.xlu0 %2501
    %2503 = vrot.lane.b32.xlu0 %v2190, 63
    %v2504 = vpop.permute.xlu0 %2503
    %2505 = vrot.lane.b32.xlu0 %v2194, 63
    %v2506 = vpop.permute.xlu0 %2505
    %2507 = vrot.lane.b32.xlu0 %v2198, 63
    %v2508 = vpop.permute.xlu0 %2507
    %2509 = vrot.lane.b32.xlu0 %v2202, 63
    %v2510 = vpop.permute.xlu0 %2509
    %v2511 = vsel %vm380, %v2508, %v2510
    %v2512 = vsel %vm380, %v2506, %v2508
    %v2513 = vsel %vm380, %v2504, %v2506
    %v2514 = vsel %vm380, %v2502, %v2504
    %v2515 = vsel %vm380, %v2500, %v2502
    %v2516 = vsel %vm380, %v2498, %v2500
    %v2517 = vsel %vm380, %v2496, %v2498
    %v2518 = vsel %vm380, %v2510, %v2496
    %2519 = vset.pattern.permute.xlu0 25
    %2520 = vperm.xlu0 %2519, %v1375
    %v2521 = vpop.permute.xlu0 %2520
    %v2523 = vmul.f32 %v2521, %v2517
    %v2524 = vmul.f32 %v2521, %v2516
    %v2525 = vmul.f32 %v2521, %v2515
    %v2526 = vmul.f32 %v2521, %v2514
    %v2527 = vmul.f32 %v2521, %v2513
    %v2528 = vmul.f32 %v2521, %v2512
    %v2529 = vmul.f32 %v2521, %v2511
    %v2530 = vmul.f32 %v2521, %v2518
    %v2531 = vadd.f32 %v2487, %v2523
    %v2532 = vadd.f32 %v2488, %v2524
    %v2533 = vadd.f32 %v2489, %v2525
    %v2534 = vadd.f32 %v2490, %v2526
    %v2535 = vadd.f32 %v2491, %v2527
    %v2536 = vadd.f32 %v2492, %v2528
    %v2537 = vadd.f32 %v2493, %v2529
    %v2538 = vadd.f32 %v2494, %v2530
    %2539 = vrot.lane.b32.xlu0 %v2174, 62
    %v2540 = vpop.permute.xlu0 %2539
    %2541 = vrot.lane.b32.xlu0 %v2178, 62
    %v2542 = vpop.permute.xlu0 %2541
    %2543 = vrot.lane.b32.xlu0 %v2182, 62
    %v2544 = vpop.permute.xlu0 %2543
    %2545 = vrot.lane.b32.xlu0 %v2186, 62
    %v2546 = vpop.permute.xlu0 %2545
    %2547 = vrot.lane.b32.xlu0 %v2190, 62
    %v2548 = vpop.permute.xlu0 %2547
    %2549 = vrot.lane.b32.xlu0 %v2194, 62
    %v2550 = vpop.permute.xlu0 %2549
    %2551 = vrot.lane.b32.xlu0 %v2198, 62
    %v2552 = vpop.permute.xlu0 %2551
    %2553 = vrot.lane.b32.xlu0 %v2202, 62
    %v2554 = vpop.permute.xlu0 %2553
    %v2555 = vsel %vm425, %v2552, %v2554
    %v2556 = vsel %vm425, %v2550, %v2552
    %v2557 = vsel %vm425, %v2548, %v2550
    %v2558 = vsel %vm425, %v2546, %v2548
    %v2559 = vsel %vm425, %v2544, %v2546
    %v2560 = vsel %vm425, %v2542, %v2544
    %v2561 = vsel %vm425, %v2540, %v2542
    %v2562 = vsel %vm425, %v2554, %v2540
    %2563 = vset.pattern.permute.xlu0 26
    %2564 = vperm.xlu0 %2563, %v1375
    %v2565 = vpop.permute.xlu0 %2564
    %v2567 = vmul.f32 %v2565, %v2561
    %v2568 = vmul.f32 %v2565, %v2560
    %v2569 = vmul.f32 %v2565, %v2559
    %v2570 = vmul.f32 %v2565, %v2558
    %v2571 = vmul.f32 %v2565, %v2557
    %v2572 = vmul.f32 %v2565, %v2556
    %v2573 = vmul.f32 %v2565, %v2555
    %v2574 = vmul.f32 %v2565, %v2562
    %v2575 = vadd.f32 %v2531, %v2567
    %v2576 = vadd.f32 %v2532, %v2568
    %v2577 = vadd.f32 %v2533, %v2569
    %v2578 = vadd.f32 %v2534, %v2570
    %v2579 = vadd.f32 %v2535, %v2571
    %v2580 = vadd.f32 %v2536, %v2572
    %v2581 = vadd.f32 %v2537, %v2573
    %v2582 = vadd.f32 %v2538, %v2574
    %v2583 = vld [vmem:[%s2] sm:$0x7]
    %2585 = vset.pattern.permute.xlu0 0
    %2586 = vperm.xlu0 %2585, %v2583
    %v2587 = vpop.permute.xlu0 %2586
    %v2589 = vadd.f32 %v2575, %v2587
    %v2590 = vadd.f32 %v2576, %v2587
    %v2591 = vadd.f32 %v2577, %v2587
    %v2592 = vadd.f32 %v2578, %v2587
    %v2593 = vadd.f32 %v2579, %v2587
    %v2594 = vadd.f32 %v2580, %v2587
    %v2595 = vadd.f32 %v2581, %v2587
    %v2596 = vadd.f32 %v2582, %v2587
    %v2597 = vmax.f32 %v2589, 0.0
    %v2598 = vmax.f32 %v2590, 0.0
    %v2599 = vmax.f32 %v2591, 0.0
    %v2600 = vmax.f32 %v2592, 0.0
    %v2601 = vmax.f32 %v2593, 0.0
    %v2602 = vmax.f32 %v2594, 0.0
    %v2603 = vmax.f32 %v2595, 0.0
    %v2604 = vmax.f32 %v2596, 0.0
    %v2613 = vcombine.low %v2597, %v2598
    %v2614 = vcombine.low %v2599, %v2600
    %v2615 = vcombine.low %v2601, %v2602
    %v2616 = vcombine.low %v2603, %v2604
    %s2621 = scalar_lea.vmem %s3, 32
    %2622 = vst [vmem:[%s2621] sm:$0x77] %v2613
    %2623 = vst [vmem:[%s2621 + $0x8] sm:$0x77] %v2614
    %2624 = vst [vmem:[%s2621 + $0x10] sm:$0x77] %v2615
    %2625 = vst [vmem:[%s2621 + $0x18] sm:$0x77] %v2616
    // Predicated region
    $region18: #{tpu_custom_call.1} parent=1 // pred_check
      _
    $region19: #{tpu_custom_call.1} parent=1 // pred_check_branch
      %2627 = sbr.rel (0) target = $region21
    $region20: #{tpu_custom_call.1} parent=1 // pred_region
      _
    $region21: #{tpu_custom_call.1} parent=1 // pred_fallthru
      _
    // Predicated region
    $region22: #{tpu_custom_call.1} parent=1 // pred_check
      _
    $region23: #{tpu_custom_call.1} parent=1 // pred_check_branch
      %2629 = sbr.rel (0) target = $region25
    $region24: #{tpu_custom_call.1} parent=1 // pred_region
      _
    $region25: #{tpu_custom_call.1} parent=1 // pred_fallthru
      _
    %2630 = vsyncpa [#allocation3], 1

</llo_original>
